<compile_context>
chip_gen: v7x
topology: tpu7x:2x2x1
jax: 0.10.0
libtpu: 0.0.40
codegen_flags: <defaults>
</compile_context>

<pallas_src>
import functools
import math

import jax
import jax.numpy as jnp
from jax import lax
from jax.experimental import pallas as pl
from jax.experimental.pallas import tpu as pltpu


def _pick_batch_tile(batch):
    """Batch tile: a multiple of 8 (sublane tile) dividing batch, capped at 256."""
    if batch % 8 != 0:
        return batch            # a single full-size block is always legal
    for tb in (256, 128, 64, 32, 16, 8):
        if batch % tb == 0:
            return tb
    return batch


def _traj_kernel(rel_ref, obs_first_ref, obs_last_ref, wemb_ref, bemb_ref,
                 wc_ref, bc_ref, wp_ref, bp_ref, out_ref, *,
                 num_layers, obs_len, batch_tile, threshold, training):
    L = obs_len
    TB = batch_tile
    N = L * TB                                  # rows, length-major: row = l*TB + b
    E = wemb_ref.shape[1]
    OUT = out_ref.shape[1]                      # lane-dense (padded) output width

    # ---- spatial embedding: Linear(2, E) on the VPU ----------------------
    # (L, TB, 2) -> (N, 2): leading-dim merge, layout preserving for TB % 8 == 0.
    rel = rel_ref[...].reshape(N, 2)
    we = wemb_ref[...]
    x = rel[:, 0:1] * we[0:1, :] + rel[:, 1:2] * we[1:2, :] + bemb_ref[...]

    # ---- conv stack: one fused matmul per layer --------------------------
    # z = x @ [W0 | W1 | W2]; tap k's contribution to output position l is
    # z_k evaluated at position l + k - 1, i.e. a shift by one TB-row block.
    row = lax.broadcasted_iota(jnp.int32, (N, 1), 0)
    first_blk = row < TB                        # l == 0     -> no "previous" point
    last_blk = row >= N - TB                    # l == L - 1 -> no "next" point

    for layer in range(num_layers):
        z = jnp.dot(x, wc_ref[layer], preferred_element_type=jnp.float32)  # (N, 3E)
        prev_tap = jnp.where(first_blk, 0.0,
                             pltpu.roll(z[:, 0:E], TB, axis=0))
        next_tap = jnp.where(last_blk, 0.0,
                             pltpu.roll(z[:, 2 * E:], N - TB, axis=0))
        y = z[:, E:2 * E] + prev_tap + next_tap + bc_ref[layer]
        x = jnp.maximum(y, 0.0)                 # ReLU after every conv

    # ---- hidden2pos: accumulate over length positions (no reshape) -------
    pred = jnp.zeros((TB, OUT), jnp.float32) + bp_ref[...]
    for l in range(L):
        pred = pred + jnp.dot(x[l * TB:(l + 1) * TB, :], wp_ref[l],
                              preferred_element_type=jnp.float32)

    if not training:
        # eval-mode thresholding: trajectories whose first/last observed points
        # are closer than `threshold` are zeroed (torch: pred != pred -> 0.0).
        # Squared-distance compare (no sqrt); thr2 = t*|t| keeps t <= 0 "never".
        d = obs_first_ref[...] - obs_last_ref[...]                  # (TB, 2)
        dist2 = d[:, 0:1] * d[:, 0:1] + d[:, 1:2] * d[:, 1:2]       # (TB, 1)
        thr2 = threshold * abs(threshold)
        pred = jnp.where(dist2 < thr2, 0.0, pred)

    out_ref[...] = pred


def traj_estimator_threshold(obs_traj, obs_traj_rel, params, *, pred_len,
                             threshold=0.0, training=False):
    """obs_traj, obs_traj_rel: (obs_len, batch, 2) float32 (torch convention).

    Returns pred_traj_rel of shape (pred_len, batch, 2).
    """
    L, B, _ = obs_traj.shape
    num_layers = params["w_conv"].shape[0]
    P2 = 2 * pred_len
    out_w = ((P2 + 127) // 128) * 128           # lane-dense output width
    TB = _pick_batch_tile(B)
    grid = (B // TB,)

    # Kernel-layout prep (tiny; in production fold into parameter loading).
    wp = jnp.pad(params["w_h2p"], ((0, 0), (0, 0), (0, out_w - P2)))
    bp = jnp.pad(params["b_h2p"], ((0, 0), (0, out_w - P2)))
    obs_first = obs_traj[0]                     # only rows the kernel reads
    obs_last = obs_traj[L - 1]

    kernel = functools.partial(
        _traj_kernel, num_layers=num_layers, obs_len=L, batch_tile=TB,
        threshold=float(threshold), training=training)

    def fixed(shape):
        return pl.BlockSpec(shape, lambda i, _n=len(shape): (0,) * _n)

    in_specs = [
        pl.BlockSpec((L, TB, 2), lambda i: (0, i, 0)),   # obs_traj_rel
        pl.BlockSpec((TB, 2), lambda i: (i, 0)),         # first observed point
        pl.BlockSpec((TB, 2), lambda i: (i, 0)),         # last observed point
        fixed(params["w_emb"].shape),
        fixed(params["b_emb"].shape),
        fixed(params["w_conv"].shape),
        fixed(params["b_conv"].shape),
        fixed(wp.shape),
        fixed(bp.shape),
    ]
    out_specs = pl.BlockSpec((TB, out_w), lambda i: (i, 0))

    pred_pad = pl.pallas_call(
        kernel,
        out_shape=jax.ShapeDtypeStruct((B, out_w), jnp.float32),
        grid_spec=pltpu.PrefetchScalarGridSpec(
            num_scalar_prefetch=0,
            grid=grid,
            in_specs=in_specs,
            out_specs=out_specs,
        ),
        compiler_params=pltpu.CompilerParams(
            dimension_semantics=("parallel",)),
    )(obs_traj_rel, obs_first, obs_last, params["w_emb"], params["b_emb"],
      params["w_conv"], params["b_conv"], wp, bp)

    pred = pred_pad[:, :P2]
    # (B, 2P) -> (pred_len, batch, 2), matching the torch output convention.
    return jnp.transpose(pred.reshape(B, pred_len, 2), (1, 0, 2))


def init_params(key, obs_len, pred_len, embedding_dim=16, num_layers=3):
    """Deterministic synthetic parameters, stored in kernel-friendly layouts.

    w_emb:  (2, E)               Linear(2, E), x @ W form
    b_emb:  (1, E)
    w_conv: (num_layers, E, 3E)  per layer [W0 | W1 | W2], tap k in (in, out)
    b_conv: (num_layers, 1, E)   torch init: zero
    w_h2p:  (L, E, 2*pred_len)   per length-position slice of Linear(E*L, 2P)
    b_h2p:  (1, 2*pred_len)
    """
    E = embedding_dim
    ks = jax.random.split(key, 4 + num_layers)
    w_emb = jax.random.normal(ks[0], (2, E), jnp.float32) * 0.5
    b_emb = jax.random.normal(ks[1], (1, E), jnp.float32) * 0.1

    std = math.sqrt(4.0 * (1.0 - 0.0) / (3 * E))
    w_convs = []
    for i in range(num_layers):
        v = jax.random.normal(ks[2 + i], (E, E, 3), jnp.float32) * std  # (out, in, k)
        # weight_norm (dim=0) with g initialized to ||v||: effective weight == v.
        norm = jnp.sqrt(jnp.sum(v * v, axis=(1, 2), keepdims=True))
        w_eff = norm * v / norm
        taps = [w_eff[:, :, k].T for k in range(3)]           # each (E_in, E_out)
        w_convs.append(jnp.concatenate(taps, axis=1))         # (E, 3E)
    w_conv = jnp.stack(w_convs, axis=0)
    b_conv = jnp.zeros((num_layers, 1, E), jnp.float32)

    # nn.Linear(E*L, 2P): torch weight (2P, E*L) with input column c = e*L + l.
    wh = jax.random.normal(ks[2 + num_layers], (2 * pred_len, E * obs_len),
                           jnp.float32) * 0.05
    b_h2p = jax.random.normal(ks[3 + num_layers], (1, 2 * pred_len),
                              jnp.float32) * 0.05
    # per-length slices: w_h2p[l, e, :] = wh[:, e*L + l]
    w_h2p = jnp.transpose(wh.reshape(2 * pred_len, E, obs_len), (2, 1, 0))
    return dict(w_emb=w_emb, b_emb=b_emb, w_conv=w_conv, b_conv=b_conv,
                w_h2p=w_h2p, b_h2p=b_h2p)


def _reference(obs_traj, obs_traj_rel, params, pred_len, threshold,
               training=False):
    """Pure-JAX replica of the torch forward (NCL conv), for sanity checking."""
    L, B, _ = obs_traj.shape
    E = params["w_emb"].shape[1]
    num_layers = params["w_conv"].shape[0]
    emb = obs_traj_rel.reshape(-1, 2) @ params["w_emb"] + params["b_emb"]
    x = jnp.transpose(emb.reshape(L, B, E), (1, 2, 0))        # (B, E, L) NCL
    for layer in range(num_layers):
        wcat = params["w_conv"][layer]                        # (E, 3E) = [W0|W1|W2]
        xp = jnp.pad(x, ((0, 0), (0, 0), (1, 1)))
        y = (jnp.einsum("bil,io->bol", xp[:, :, 0:L], wcat[:, 0:E])
             + jnp.einsum("bil,io->bol", xp[:, :, 1:L + 1], wcat[:, E:2 * E])
             + jnp.einsum("bil,io->bol", xp[:, :, 2:L + 2], wcat[:, 2 * E:])
             + params["b_conv"][layer].reshape(1, E, 1))
        x = jnp.maximum(y, 0.0)
    state = x.reshape(B, E * L)                               # torch .view: col = e*L + l
    wh = jnp.transpose(params["w_h2p"], (1, 0, 2)).reshape(E * L, 2 * pred_len)
    pred = state @ wh + params["b_h2p"]
    if not training:
        obs = jnp.transpose(obs_traj, (1, 0, 2))
        d = obs[:, 0, :] - obs[:, -1, :]
        dist = jnp.sqrt(jnp.sum(d * d, axis=-1, keepdims=True))
        pred = jnp.where(dist < threshold, 0.0, pred)
    return jnp.transpose(pred.reshape(B, pred_len, 2), (1, 0, 2))


if __name__ == "__main__":
    obs_len, pred_len = 8, 8
    embedding_dim, num_layers = 16, 3
    threshold = 1.0

    key = jax.random.PRNGKey(0)
    k_obs, k_rel, k_par = jax.random.split(key, 3)
    params = init_params(k_par, obs_len, pred_len, embedding_dim, num_layers)

    def check(batch, training, ko, kr):
        obs = jax.random.normal(ko, (obs_len, batch, 2), jnp.float32)
        rel = jax.random.normal(kr, (obs_len, batch, 2), jnp.float32)
        run = jax.jit(functools.partial(
            traj_estimator_threshold, pred_len=pred_len,
            threshold=threshold, training=training))
        out = jax.block_until_ready(run(obs, rel, params))
        assert out.shape == (pred_len, batch, 2)
        ref = _reference(obs, rel, params, pred_len, threshold, training)
        err = float(jnp.max(jnp.abs(out - ref)))
        assert jnp.allclose(out, ref, atol=1e-4, rtol=1e-4), err

    ko1, ko2 = jax.random.split(k_obs)
    kr1, kr2 = jax.random.split(k_rel)
    check(batch=8, training=False, ko=ko1, kr=kr1)    # eval path (threshold active)
    check(batch=8, training=True, ko=ko1, kr=kr1)     # training path (no threshold)
    check(batch=48, training=False, ko=ko2, kr=kr2)   # multi-block "parallel" grid
    print("KERNEL_OK")
</pallas_src>

<mosaic_0001>
module attributes {stable_mosaic.version = 11 : i64} {
  func.func @_traj_kernel(%arg0: i32, %arg1: memref<8x8x2xf32, #tpu.memory_space<vmem>>, %arg2: memref<8x2xf32, #tpu.memory_space<vmem>>, %arg3: memref<8x2xf32, #tpu.memory_space<vmem>>, %arg4: memref<2x16xf32, #tpu.memory_space<vmem>>, %arg5: memref<1x16xf32, #tpu.memory_space<vmem>>, %arg6: memref<3x16x48xf32, #tpu.memory_space<vmem>>, %arg7: memref<3x1x16xf32, #tpu.memory_space<vmem>>, %arg8: memref<8x16x128xf32, #tpu.memory_space<vmem>>, %arg9: memref<1x128xf32, #tpu.memory_space<vmem>>, %arg10: memref<8x128xf32, #tpu.memory_space<vmem>>) attributes {dimension_semantics = [#tpu.dimension_semantics<parallel>], iteration_bounds = array<i64: 1>, scalar_prefetch = 0 : i64, scratch_operands = 0 : i64, tpu.core_type = #tpu.core_type<tc>, window_params = [{transform_indices = @transform_0, window_bounds = array<i64: 8, 8, 2>}, {transform_indices = @transform_1, window_bounds = array<i64: 8, 2>}, {transform_indices = @transform_2, window_bounds = array<i64: 8, 2>}, {pipeline_mode = #tpu.pipeline_mode<synchronous>, transform_indices = @transform_3, window_bounds = array<i64: 2, 16>}, {pipeline_mode = #tpu.pipeline_mode<synchronous>, transform_indices = @transform_4, window_bounds = array<i64: 1, 16>}, {pipeline_mode = #tpu.pipeline_mode<synchronous>, transform_indices = @transform_5, window_bounds = array<i64: 3, 16, 48>}, {pipeline_mode = #tpu.pipeline_mode<synchronous>, transform_indices = @transform_6, window_bounds = array<i64: 3, 1, 16>}, {pipeline_mode = #tpu.pipeline_mode<synchronous>, transform_indices = @transform_7, window_bounds = array<i64: 8, 16, 128>}, {pipeline_mode = #tpu.pipeline_mode<synchronous>, transform_indices = @transform_8, window_bounds = array<i64: 1, 128>}, {transform_indices = @transform_9, window_bounds = array<i64: 8, 128>}]} {
    %c0 = arith.constant 0 : index
    %c0_0 = arith.constant 0 : index
    %c0_1 = arith.constant 0 : index
    %0 = vector.load %arg1[%c0, %c0_0, %c0_1] : memref<8x8x2xf32, #tpu.memory_space<vmem>>, vector<8x8x2xf32>
    %1 = vector.shape_cast %0 : vector<8x8x2xf32> to vector<64x2xf32>
    %c0_2 = arith.constant 0 : index
    %c0_3 = arith.constant 0 : index
    %2 = vector.load %arg4[%c0_2, %c0_3] : memref<2x16xf32, #tpu.memory_space<vmem>>, vector<2x16xf32>
    %3 = vector.extract_strided_slice %1 {offsets = [0, 0], sizes = [64, 1], strides = [1, 1]} : vector<64x2xf32> to vector<64x1xf32>
    %4 = vector.extract_strided_slice %2 {offsets = [0, 0], sizes = [1, 16], strides = [1, 1]} : vector<2x16xf32> to vector<1x16xf32>
    %5 = vector.broadcast %3 : vector<64x1xf32> to vector<64x16xf32>
    %6 = vector.broadcast %4 : vector<1x16xf32> to vector<64x16xf32>
    %7 = arith.mulf %5, %6 : vector<64x16xf32>
    %8 = vector.extract_strided_slice %1 {offsets = [0, 1], sizes = [64, 1], strides = [1, 1]} : vector<64x2xf32> to vector<64x1xf32>
    %9 = vector.extract_strided_slice %2 {offsets = [1, 0], sizes = [1, 16], strides = [1, 1]} : vector<2x16xf32> to vector<1x16xf32>
    %10 = vector.broadcast %8 : vector<64x1xf32> to vector<64x16xf32>
    %11 = vector.broadcast %9 : vector<1x16xf32> to vector<64x16xf32>
    %12 = arith.mulf %10, %11 : vector<64x16xf32>
    %13 = arith.addf %7, %12 : vector<64x16xf32>
    %c0_4 = arith.constant 0 : index
    %c0_5 = arith.constant 0 : index
    %14 = vector.load %arg5[%c0_4, %c0_5] : memref<1x16xf32, #tpu.memory_space<vmem>>, vector<1x16xf32>
    %15 = vector.broadcast %14 : vector<1x16xf32> to vector<64x16xf32>
    %16 = arith.addf %13, %15 : vector<64x16xf32>
    %17 = tpu.iota {dimensions = array<i32: 0>} : vector<64x1xi32>
    %c8_i32 = arith.constant 8 : i32
    %18 = vector.broadcast %c8_i32 : i32 to vector<64x1xi32>
    %19 = arith.cmpi slt, %17, %18 : vector<64x1xi32>
    %c56_i32 = arith.constant 56 : i32
    %20 = vector.broadcast %c56_i32 : i32 to vector<64x1xi32>
    %21 = arith.cmpi sge, %17, %20 : vector<64x1xi32>
    %c0_6 = arith.constant 0 : index
    %c0_7 = arith.constant 0 : index
    %c0_8 = arith.constant 0 : index
    %22 = vector.load %arg6[%c0_6, %c0_7, %c0_8] : memref<3x16x48xf32, #tpu.memory_space<vmem>>, vector<1x16x48xf32>
    %23 = vector.shape_cast %22 : vector<1x16x48xf32> to vector<16x48xf32>
    %cst = arith.constant dense<0.000000e+00> : vector<64x48xf32>
    %24 = tpu.matmul %16, %23, %cst {dimension_numbers = #tpu.dot_dimension_numbers<[1], [0], [0], [1], [0, 0, 1, 1], [], []>} : vector<64x16xf32>, vector<16x48xf32>, vector<64x48xf32> -> vector<64x48xf32>
    %25 = vector.extract_strided_slice %24 {offsets = [0, 0], sizes = [64, 16], strides = [1, 1]} : vector<64x48xf32> to vector<64x16xf32>
    %c8_i32_9 = arith.constant 8 : i32
    %26 = tpu.dynamic_rotate %25 by %c8_i32_9 dim 0 : vector<64x16xf32>, i32 -> vector<64x16xf32>
    %cst_10 = arith.constant 0.000000e+00 : f32
    %27 = vector.shape_cast %19 : vector<64x1xi1> to vector<64x1xi1>
    %28 = vector.broadcast %27 : vector<64x1xi1> to vector<64x16xi1>
    %29 = vector.broadcast %cst_10 : f32 to vector<64x16xf32>
    %30 = arith.select %28, %29, %26 : vector<64x16xi1>, vector<64x16xf32>
    %31 = vector.extract_strided_slice %24 {offsets = [0, 32], sizes = [64, 16], strides = [1, 1]} : vector<64x48xf32> to vector<64x16xf32>
    %c56_i32_11 = arith.constant 56 : i32
    %32 = tpu.dynamic_rotate %31 by %c56_i32_11 dim 0 : vector<64x16xf32>, i32 -> vector<64x16xf32>
    %cst_12 = arith.constant 0.000000e+00 : f32
    %33 = vector.shape_cast %21 : vector<64x1xi1> to vector<64x1xi1>
    %34 = vector.broadcast %33 : vector<64x1xi1> to vector<64x16xi1>
    %35 = vector.broadcast %cst_12 : f32 to vector<64x16xf32>
    %36 = arith.select %34, %35, %32 : vector<64x16xi1>, vector<64x16xf32>
    %37 = vector.extract_strided_slice %24 {offsets = [0, 16], sizes = [64, 16], strides = [1, 1]} : vector<64x48xf32> to vector<64x16xf32>
    %38 = arith.addf %37, %30 : vector<64x16xf32>
    %39 = arith.addf %38, %36 : vector<64x16xf32>
    %c0_13 = arith.constant 0 : index
    %c0_14 = arith.constant 0 : index
    %c0_15 = arith.constant 0 : index
    %40 = vector.load %arg7[%c0_13, %c0_14, %c0_15] : memref<3x1x16xf32, #tpu.memory_space<vmem>>, vector<1x1x16xf32>
    %41 = vector.shape_cast %40 : vector<1x1x16xf32> to vector<1x16xf32>
    %42 = vector.broadcast %41 : vector<1x16xf32> to vector<64x16xf32>
    %43 = arith.addf %39, %42 : vector<64x16xf32>
    %cst_16 = arith.constant 0.000000e+00 : f32
    %44 = vector.broadcast %cst_16 : f32 to vector<64x16xf32>
    %45 = arith.maximumf %43, %44 : vector<64x16xf32>
    %c1 = arith.constant 1 : index
    %c0_17 = arith.constant 0 : index
    %c0_18 = arith.constant 0 : index
    %46 = vector.load %arg6[%c1, %c0_17, %c0_18] : memref<3x16x48xf32, #tpu.memory_space<vmem>>, vector<1x16x48xf32>
    %47 = vector.shape_cast %46 : vector<1x16x48xf32> to vector<16x48xf32>
    %cst_19 = arith.constant dense<0.000000e+00> : vector<64x48xf32>
    %48 = tpu.matmul %45, %47, %cst_19 {dimension_numbers = #tpu.dot_dimension_numbers<[1], [0], [0], [1], [0, 0, 1, 1], [], []>} : vector<64x16xf32>, vector<16x48xf32>, vector<64x48xf32> -> vector<64x48xf32>
    %49 = vector.extract_strided_slice %48 {offsets = [0, 0], sizes = [64, 16], strides = [1, 1]} : vector<64x48xf32> to vector<64x16xf32>
    %c8_i32_20 = arith.constant 8 : i32
    %50 = tpu.dynamic_rotate %49 by %c8_i32_20 dim 0 : vector<64x16xf32>, i32 -> vector<64x16xf32>
    %cst_21 = arith.constant 0.000000e+00 : f32
    %51 = vector.shape_cast %19 : vector<64x1xi1> to vector<64x1xi1>
    %52 = vector.broadcast %51 : vector<64x1xi1> to vector<64x16xi1>
    %53 = vector.broadcast %cst_21 : f32 to vector<64x16xf32>
    %54 = arith.select %52, %53, %50 : vector<64x16xi1>, vector<64x16xf32>
    %55 = vector.extract_strided_slice %48 {offsets = [0, 32], sizes = [64, 16], strides = [1, 1]} : vector<64x48xf32> to vector<64x16xf32>
    %c56_i32_22 = arith.constant 56 : i32
    %56 = tpu.dynamic_rotate %55 by %c56_i32_22 dim 0 : vector<64x16xf32>, i32 -> vector<64x16xf32>
    %cst_23 = arith.constant 0.000000e+00 : f32
    %57 = vector.shape_cast %21 : vector<64x1xi1> to vector<64x1xi1>
    %58 = vector.broadcast %57 : vector<64x1xi1> to vector<64x16xi1>
    %59 = vector.broadcast %cst_23 : f32 to vector<64x16xf32>
    %60 = arith.select %58, %59, %56 : vector<64x16xi1>, vector<64x16xf32>
    %61 = vector.extract_strided_slice %48 {offsets = [0, 16], sizes = [64, 16], strides = [1, 1]} : vector<64x48xf32> to vector<64x16xf32>
    %62 = arith.addf %61, %54 : vector<64x16xf32>
    %63 = arith.addf %62, %60 : vector<64x16xf32>
    %c1_24 = arith.constant 1 : index
    %c0_25 = arith.constant 0 : index
    %c0_26 = arith.constant 0 : index
    %64 = vector.load %arg7[%c1_24, %c0_25, %c0_26] : memref<3x1x16xf32, #tpu.memory_space<vmem>>, vector<1x1x16xf32>
    %65 = vector.shape_cast %64 : vector<1x1x16xf32> to vector<1x16xf32>
    %66 = vector.broadcast %65 : vector<1x16xf32> to vector<64x16xf32>
    %67 = arith.addf %63, %66 : vector<64x16xf32>
    %cst_27 = arith.constant 0.000000e+00 : f32
    %68 = vector.broadcast %cst_27 : f32 to vector<64x16xf32>
    %69 = arith.maximumf %67, %68 : vector<64x16xf32>
    %c2 = arith.constant 2 : index
    %c0_28 = arith.constant 0 : index
    %c0_29 = arith.constant 0 : index
    %70 = vector.load %arg6[%c2, %c0_28, %c0_29] : memref<3x16x48xf32, #tpu.memory_space<vmem>>, vector<1x16x48xf32>
    %71 = vector.shape_cast %70 : vector<1x16x48xf32> to vector<16x48xf32>
    %cst_30 = arith.constant dense<0.000000e+00> : vector<64x48xf32>
    %72 = tpu.matmul %69, %71, %cst_30 {dimension_numbers = #tpu.dot_dimension_numbers<[1], [0], [0], [1], [0, 0, 1, 1], [], []>} : vector<64x16xf32>, vector<16x48xf32>, vector<64x48xf32> -> vector<64x48xf32>
    %73 = vector.extract_strided_slice %72 {offsets = [0, 0], sizes = [64, 16], strides = [1, 1]} : vector<64x48xf32> to vector<64x16xf32>
    %c8_i32_31 = arith.constant 8 : i32
    %74 = tpu.dynamic_rotate %73 by %c8_i32_31 dim 0 : vector<64x16xf32>, i32 -> vector<64x16xf32>
    %cst_32 = arith.constant 0.000000e+00 : f32
    %75 = vector.shape_cast %19 : vector<64x1xi1> to vector<64x1xi1>
    %76 = vector.broadcast %75 : vector<64x1xi1> to vector<64x16xi1>
    %77 = vector.broadcast %cst_32 : f32 to vector<64x16xf32>
    %78 = arith.select %76, %77, %74 : vector<64x16xi1>, vector<64x16xf32>
    %79 = vector.extract_strided_slice %72 {offsets = [0, 32], sizes = [64, 16], strides = [1, 1]} : vector<64x48xf32> to vector<64x16xf32>
    %c56_i32_33 = arith.constant 56 : i32
    %80 = tpu.dynamic_rotate %79 by %c56_i32_33 dim 0 : vector<64x16xf32>, i32 -> vector<64x16xf32>
    %cst_34 = arith.constant 0.000000e+00 : f32
    %81 = vector.shape_cast %21 : vector<64x1xi1> to vector<64x1xi1>
    %82 = vector.broadcast %81 : vector<64x1xi1> to vector<64x16xi1>
    %83 = vector.broadcast %cst_34 : f32 to vector<64x16xf32>
    %84 = arith.select %82, %83, %80 : vector<64x16xi1>, vector<64x16xf32>
    %85 = vector.extract_strided_slice %72 {offsets = [0, 16], sizes = [64, 16], strides = [1, 1]} : vector<64x48xf32> to vector<64x16xf32>
    %86 = arith.addf %85, %78 : vector<64x16xf32>
    %87 = arith.addf %86, %84 : vector<64x16xf32>
    %c2_35 = arith.constant 2 : index
    %c0_36 = arith.constant 0 : index
    %c0_37 = arith.constant 0 : index
    %88 = vector.load %arg7[%c2_35, %c0_36, %c0_37] : memref<3x1x16xf32, #tpu.memory_space<vmem>>, vector<1x1x16xf32>
    %89 = vector.shape_cast %88 : vector<1x1x16xf32> to vector<1x16xf32>
    %90 = vector.broadcast %89 : vector<1x16xf32> to vector<64x16xf32>
    %91 = arith.addf %87, %90 : vector<64x16xf32>
    %cst_38 = arith.constant 0.000000e+00 : f32
    %92 = vector.broadcast %cst_38 : f32 to vector<64x16xf32>
    %93 = arith.maximumf %91, %92 : vector<64x16xf32>
    %cst_39 = arith.constant 0.000000e+00 : f32
    %94 = vector.broadcast %cst_39 : f32 to vector<8x128xf32>
    %c0_40 = arith.constant 0 : index
    %c0_41 = arith.constant 0 : index
    %95 = vector.load %arg9[%c0_40, %c0_41] : memref<1x128xf32, #tpu.memory_space<vmem>>, vector<1x128xf32>
    %96 = vector.broadcast %95 : vector<1x128xf32> to vector<8x128xf32>
    %97 = arith.addf %94, %96 : vector<8x128xf32>
    %98 = vector.extract_strided_slice %93 {offsets = [0, 0], sizes = [8, 16], strides = [1, 1]} : vector<64x16xf32> to vector<8x16xf32>
    %c0_42 = arith.constant 0 : index
    %c0_43 = arith.constant 0 : index
    %c0_44 = arith.constant 0 : index
    %99 = vector.load %arg8[%c0_42, %c0_43, %c0_44] : memref<8x16x128xf32, #tpu.memory_space<vmem>>, vector<1x16x128xf32>
    %100 = vector.shape_cast %99 : vector<1x16x128xf32> to vector<16x128xf32>
    %cst_45 = arith.constant dense<0.000000e+00> : vector<8x128xf32>
    %101 = tpu.matmul %98, %100, %cst_45 {dimension_numbers = #tpu.dot_dimension_numbers<[1], [0], [0], [1], [0, 0, 1, 1], [], []>} : vector<8x16xf32>, vector<16x128xf32>, vector<8x128xf32> -> vector<8x128xf32>
    %102 = arith.addf %97, %101 : vector<8x128xf32>
    %103 = vector.extract_strided_slice %93 {offsets = [8, 0], sizes = [8, 16], strides = [1, 1]} : vector<64x16xf32> to vector<8x16xf32>
    %c1_46 = arith.constant 1 : index
    %c0_47 = arith.constant 0 : index
    %c0_48 = arith.constant 0 : index
    %104 = vector.load %arg8[%c1_46, %c0_47, %c0_48] : memref<8x16x128xf32, #tpu.memory_space<vmem>>, vector<1x16x128xf32>
    %105 = vector.shape_cast %104 : vector<1x16x128xf32> to vector<16x128xf32>
    %cst_49 = arith.constant dense<0.000000e+00> : vector<8x128xf32>
    %106 = tpu.matmul %103, %105, %cst_49 {dimension_numbers = #tpu.dot_dimension_numbers<[1], [0], [0], [1], [0, 0, 1, 1], [], []>} : vector<8x16xf32>, vector<16x128xf32>, vector<8x128xf32> -> vector<8x128xf32>
    %107 = arith.addf %102, %106 : vector<8x128xf32>
    %108 = vector.extract_strided_slice %93 {offsets = [16, 0], sizes = [8, 16], strides = [1, 1]} : vector<64x16xf32> to vector<8x16xf32>
    %c2_50 = arith.constant 2 : index
    %c0_51 = arith.constant 0 : index
    %c0_52 = arith.constant 0 : index
    %109 = vector.load %arg8[%c2_50, %c0_51, %c0_52] : memref<8x16x128xf32, #tpu.memory_space<vmem>>, vector<1x16x128xf32>
    %110 = vector.shape_cast %109 : vector<1x16x128xf32> to vector<16x128xf32>
    %cst_53 = arith.constant dense<0.000000e+00> : vector<8x128xf32>
    %111 = tpu.matmul %108, %110, %cst_53 {dimension_numbers = #tpu.dot_dimension_numbers<[1], [0], [0], [1], [0, 0, 1, 1], [], []>} : vector<8x16xf32>, vector<16x128xf32>, vector<8x128xf32> -> vector<8x128xf32>
    %112 = arith.addf %107, %111 : vector<8x128xf32>
    %113 = vector.extract_strided_slice %93 {offsets = [24, 0], sizes = [8, 16], strides = [1, 1]} : vector<64x16xf32> to vector<8x16xf32>
    %c3 = arith.constant 3 : index
    %c0_54 = arith.constant 0 : index
    %c0_55 = arith.constant 0 : index
    %114 = vector.load %arg8[%c3, %c0_54, %c0_55] : memref<8x16x128xf32, #tpu.memory_space<vmem>>, vector<1x16x128xf32>
    %115 = vector.shape_cast %114 : vector<1x16x128xf32> to vector<16x128xf32>
    %cst_56 = arith.constant dense<0.000000e+00> : vector<8x128xf32>
    %116 = tpu.matmul %113, %115, %cst_56 {dimension_numbers = #tpu.dot_dimension_numbers<[1], [0], [0], [1], [0, 0, 1, 1], [], []>} : vector<8x16xf32>, vector<16x128xf32>, vector<8x128xf32> -> vector<8x128xf32>
    %117 = arith.addf %112, %116 : vector<8x128xf32>
    %118 = vector.extract_strided_slice %93 {offsets = [32, 0], sizes = [8, 16], strides = [1, 1]} : vector<64x16xf32> to vector<8x16xf32>
    %c4 = arith.constant 4 : index
    %c0_57 = arith.constant 0 : index
    %c0_58 = arith.constant 0 : index
    %119 = vector.load %arg8[%c4, %c0_57, %c0_58] : memref<8x16x128xf32, #tpu.memory_space<vmem>>, vector<1x16x128xf32>
    %120 = vector.shape_cast %119 : vector<1x16x128xf32> to vector<16x128xf32>
    %cst_59 = arith.constant dense<0.000000e+00> : vector<8x128xf32>
    %121 = tpu.matmul %118, %120, %cst_59 {dimension_numbers = #tpu.dot_dimension_numbers<[1], [0], [0], [1], [0, 0, 1, 1], [], []>} : vector<8x16xf32>, vector<16x128xf32>, vector<8x128xf32> -> vector<8x128xf32>
    %122 = arith.addf %117, %121 : vector<8x128xf32>
    %123 = vector.extract_strided_slice %93 {offsets = [40, 0], sizes = [8, 16], strides = [1, 1]} : vector<64x16xf32> to vector<8x16xf32>
    %c5 = arith.constant 5 : index
    %c0_60 = arith.constant 0 : index
    %c0_61 = arith.constant 0 : index
    %124 = vector.load %arg8[%c5, %c0_60, %c0_61] : memref<8x16x128xf32, #tpu.memory_space<vmem>>, vector<1x16x128xf32>
    %125 = vector.shape_cast %124 : vector<1x16x128xf32> to vector<16x128xf32>
    %cst_62 = arith.constant dense<0.000000e+00> : vector<8x128xf32>
    %126 = tpu.matmul %123, %125, %cst_62 {dimension_numbers = #tpu.dot_dimension_numbers<[1], [0], [0], [1], [0, 0, 1, 1], [], []>} : vector<8x16xf32>, vector<16x128xf32>, vector<8x128xf32> -> vector<8x128xf32>
    %127 = arith.addf %122, %126 : vector<8x128xf32>
    %128 = vector.extract_strided_slice %93 {offsets = [48, 0], sizes = [8, 16], strides = [1, 1]} : vector<64x16xf32> to vector<8x16xf32>
    %c6 = arith.constant 6 : index
    %c0_63 = arith.constant 0 : index
    %c0_64 = arith.constant 0 : index
    %129 = vector.load %arg8[%c6, %c0_63, %c0_64] : memref<8x16x128xf32, #tpu.memory_space<vmem>>, vector<1x16x128xf32>
    %130 = vector.shape_cast %129 : vector<1x16x128xf32> to vector<16x128xf32>
    %cst_65 = arith.constant dense<0.000000e+00> : vector<8x128xf32>
    %131 = tpu.matmul %128, %130, %cst_65 {dimension_numbers = #tpu.dot_dimension_numbers<[1], [0], [0], [1], [0, 0, 1, 1], [], []>} : vector<8x16xf32>, vector<16x128xf32>, vector<8x128xf32> -> vector<8x128xf32>
    %132 = arith.addf %127, %131 : vector<8x128xf32>
    %133 = vector.extract_strided_slice %93 {offsets = [56, 0], sizes = [8, 16], strides = [1, 1]} : vector<64x16xf32> to vector<8x16xf32>
    %c7 = arith.constant 7 : index
    %c0_66 = arith.constant 0 : index
    %c0_67 = arith.constant 0 : index
    %134 = vector.load %arg8[%c7, %c0_66, %c0_67] : memref<8x16x128xf32, #tpu.memory_space<vmem>>, vector<1x16x128xf32>
    %135 = vector.shape_cast %134 : vector<1x16x128xf32> to vector<16x128xf32>
    %cst_68 = arith.constant dense<0.000000e+00> : vector<8x128xf32>
    %136 = tpu.matmul %133, %135, %cst_68 {dimension_numbers = #tpu.dot_dimension_numbers<[1], [0], [0], [1], [0, 0, 1, 1], [], []>} : vector<8x16xf32>, vector<16x128xf32>, vector<8x128xf32> -> vector<8x128xf32>
    %137 = arith.addf %132, %136 : vector<8x128xf32>
    %c0_69 = arith.constant 0 : index
    %c0_70 = arith.constant 0 : index
    %138 = vector.load %arg2[%c0_69, %c0_70] : memref<8x2xf32, #tpu.memory_space<vmem>>, vector<8x2xf32>
    %c0_71 = arith.constant 0 : index
    %c0_72 = arith.constant 0 : index
    %139 = vector.load %arg3[%c0_71, %c0_72] : memref<8x2xf32, #tpu.memory_space<vmem>>, vector<8x2xf32>
    %140 = arith.subf %138, %139 : vector<8x2xf32>
    %141 = vector.extract_strided_slice %140 {offsets = [0, 0], sizes = [8, 1], strides = [1, 1]} : vector<8x2xf32> to vector<8x1xf32>
    %142 = vector.extract_strided_slice %140 {offsets = [0, 0], sizes = [8, 1], strides = [1, 1]} : vector<8x2xf32> to vector<8x1xf32>
    %143 = arith.mulf %141, %142 : vector<8x1xf32>
    %144 = vector.extract_strided_slice %140 {offsets = [0, 1], sizes = [8, 1], strides = [1, 1]} : vector<8x2xf32> to vector<8x1xf32>
    %145 = vector.extract_strided_slice %140 {offsets = [0, 1], sizes = [8, 1], strides = [1, 1]} : vector<8x2xf32> to vector<8x1xf32>
    %146 = arith.mulf %144, %145 : vector<8x1xf32>
    %147 = arith.addf %143, %146 : vector<8x1xf32>
    %cst_73 = arith.constant 1.000000e+00 : f32
    %148 = vector.broadcast %cst_73 : f32 to vector<8x1xf32>
    %149 = arith.cmpf olt, %147, %148 : vector<8x1xf32>
    %cst_74 = arith.constant 0.000000e+00 : f32
    %150 = vector.shape_cast %149 : vector<8x1xi1> to vector<8x1xi1>
    %151 = vector.broadcast %150 : vector<8x1xi1> to vector<8x128xi1>
    %152 = vector.broadcast %cst_74 : f32 to vector<8x128xf32>
    %153 = arith.select %151, %152, %137 : vector<8x128xi1>, vector<8x128xf32>
    %c0_75 = arith.constant 0 : index
    %c0_76 = arith.constant 0 : index
    %154 = vector.load %arg10[%c0_75, %c0_76] : memref<8x128xf32, #tpu.memory_space<vmem>>, vector<8x128xf32>
    tpu.vector_store %arg10[%c0_75, %c0_76], %153 {strides = array<i32>} : memref<8x128xf32, #tpu.memory_space<vmem>>, vector<8x128xf32>,
    return
  }
  func.func @transform_0(%arg0: i32) -> (i32, i32, i32) {
    %c0_i32 = arith.constant 0 : i32
    %c0_i32_0 = arith.constant 0 : i32
    %c0_i32_1 = arith.constant 0 : i32
    return %c0_i32, %arg0, %c0_i32_0 : i32, i32, i32
  }
  func.func @transform_1(%arg0: i32) -> (i32, i32) {
    %c0_i32 = arith.constant 0 : i32
    %c0_i32_0 = arith.constant 0 : i32
    return %arg0, %c0_i32 : i32, i32
  }
  func.func @transform_2(%arg0: i32) -> (i32, i32) {
    %c0_i32 = arith.constant 0 : i32
    %c0_i32_0 = arith.constant 0 : i32
    return %arg0, %c0_i32 : i32, i32
  }
  func.func @transform_3(%arg0: i32) -> (i32, i32) {
    %c0_i32 = arith.constant 0 : i32
    %c0_i32_0 = arith.constant 0 : i32
    %c0_i32_1 = arith.constant 0 : i32
    return %c0_i32, %c0_i32_0 : i32, i32
  }
  func.func @transform_4(%arg0: i32) -> (i32, i32) {
    %c0_i32 = arith.constant 0 : i32
    %c0_i32_0 = arith.constant 0 : i32
    %c0_i32_1 = arith.constant 0 : i32
    return %c0_i32, %c0_i32_0 : i32, i32
  }
  func.func @transform_5(%arg0: i32) -> (i32, i32, i32) {
    %c0_i32 = arith.constant 0 : i32
    %c0_i32_0 = arith.constant 0 : i32
    %c0_i32_1 = arith.constant 0 : i32
    %c0_i32_2 = arith.constant 0 : i32
    return %c0_i32, %c0_i32_0, %c0_i32_1 : i32, i32, i32
  }
  func.func @transform_6(%arg0: i32) -> (i32, i32, i32) {
    %c0_i32 = arith.constant 0 : i32
    %c0_i32_0 = arith.constant 0 : i32
    %c0_i32_1 = arith.constant 0 : i32
    %c0_i32_2 = arith.constant 0 : i32
    return %c0_i32, %c0_i32_0, %c0_i32_1 : i32, i32, i32
  }
  func.func @transform_7(%arg0: i32) -> (i32, i32, i32) {
    %c0_i32 = arith.constant 0 : i32
    %c0_i32_0 = arith.constant 0 : i32
    %c0_i32_1 = arith.constant 0 : i32
    %c0_i32_2 = arith.constant 0 : i32
    return %c0_i32, %c0_i32_0, %c0_i32_1 : i32, i32, i32
  }
  func.func @transform_8(%arg0: i32) -> (i32, i32) {
    %c0_i32 = arith.constant 0 : i32
    %c0_i32_0 = arith.constant 0 : i32
    %c0_i32_1 = arith.constant 0 : i32
    return %c0_i32, %c0_i32_0 : i32, i32
  }
  func.func @transform_9(%arg0: i32) -> (i32, i32) {
    %c0_i32 = arith.constant 0 : i32
    %c0_i32_0 = arith.constant 0 : i32
    return %arg0, %c0_i32 : i32, i32
  }
}

</mosaic_0001>

<llo_original>
// kernel: traj_estimator_threshold.1
$region0: #{traj_estimator_threshold.1}
  #allocation0 [shape = 'u32[]', space=smem, size = 0x4, offset = 0x4, fixed_abs, tag = 'smem constant byte address 0x4 - core index']
  #allocation1 [shape = 'u32[144,128]{1,0:T(1,128)}', space=vmem, size = 0x12000, scoped, tag = 'internal scratch']
  %s0 = inlined_call_operand.vmem [shape: f32[8,8,2], index: 0, kind: input, shape index: {}]
  %s1 = inlined_call_operand.vmem [shape: f32[8,2], index: 1, kind: input, shape index: {}]
  %s2 = inlined_call_operand.vmem [shape: f32[8,2], index: 2, kind: input, shape index: {}]
  %s3 = inlined_call_operand.vmem [shape: f32[2,16], index: 3, kind: input, shape index: {}]
  %s4 = inlined_call_operand.vmem [shape: f32[1,16], index: 4, kind: input, shape index: {}]
  %s5 = inlined_call_operand.vmem [shape: f32[3,16,48], index: 5, kind: input, shape index: {}]
  %s6 = inlined_call_operand.vmem [shape: f32[3,1,16], index: 6, kind: input, shape index: {}]
  %s7 = inlined_call_operand.vmem [shape: f32[8,16,128], index: 7, kind: input, shape index: {}]
  %s8 = inlined_call_operand.vmem [shape: f32[1,128], index: 8, kind: input, shape index: {}]
  %s9 = inlined_call_operand.vmem [shape: f32[8,128], index: 9, kind: output, shape index: {}]
  %s10 = sld [smem:[#allocation0]]
  $region46: #{traj_estimator_threshold.1} parent=0
    _
  %s12 = ssub.s32 1, %s10
  %s13 = scalar_select 0, %s12, %s10
  // Predicated region
  $region2: #{traj_estimator_threshold.1} parent=0 // pred_check
    _
  $region3: #{traj_estimator_threshold.1} parent=0 // pred_check_branch
    %15 = sbr.rel (0) target = $region5
  $region4: #{traj_estimator_threshold.1} parent=0 // pred_region
    _
  $region5: #{traj_estimator_threshold.1} parent=0 // pred_fallthru
    _
  // Predicated region
  $region6: #{traj_estimator_threshold.1} parent=0 // pred_check
    _
  $region7: #{traj_estimator_threshold.1} parent=0 // pred_check_branch
    %17 = sbr.rel (0) target = $region9
  $region8: #{traj_estimator_threshold.1} parent=0 // pred_region
    _
  $region9: #{traj_estimator_threshold.1} parent=0 // pred_fallthru
    _
  // Predicated region
  $region10: #{traj_estimator_threshold.1} parent=0 // pred_check
    _
  $region11: #{traj_estimator_threshold.1} parent=0 // pred_check_branch
    %19 = sbr.rel (0) target = $region13
  $region12: #{traj_estimator_threshold.1} parent=0 // pred_region
    _
  $region13: #{traj_estimator_threshold.1} parent=0 // pred_fallthru
    _
  // Predicated region
  $region14: #{traj_estimator_threshold.1} parent=0 // pred_check
    _
  $region15: #{traj_estimator_threshold.1} parent=0 // pred_check_branch
    %21 = sbr.rel (0) target = $region17
  $region16: #{traj_estimator_threshold.1} parent=0 // pred_region
    _
  $region17: #{traj_estimator_threshold.1} parent=0 // pred_fallthru
    _
  // Predicated region
  $region18: #{traj_estimator_threshold.1} parent=0 // pred_check
    _
  $region19: #{traj_estimator_threshold.1} parent=0 // pred_check_branch
    %23 = sbr.rel (0) target = $region21
  $region20: #{traj_estimator_threshold.1} parent=0 // pred_region
    _
  $region21: #{traj_estimator_threshold.1} parent=0 // pred_fallthru
    _
  // Predicated region
  $region22: #{traj_estimator_threshold.1} parent=0 // pred_check
    _
  $region23: #{traj_estimator_threshold.1} parent=0 // pred_check_branch
    %25 = sbr.rel (0) target = $region25
  $region24: #{traj_estimator_threshold.1} parent=0 // pred_region
    _
  $region25: #{traj_estimator_threshold.1} parent=0 // pred_fallthru
    _
  // Predicated region
  $region26: #{traj_estimator_threshold.1} parent=0 // pred_check
    _
  $region27: #{traj_estimator_threshold.1} parent=0 // pred_check_branch
    %27 = sbr.rel (0) target = $region29
  $region28: #{traj_estimator_threshold.1} parent=0 // pred_region
    _
  $region29: #{traj_estimator_threshold.1} parent=0 // pred_fallthru
    _
  // Predicated region
  $region30: #{traj_estimator_threshold.1} parent=0 // pred_check
    _
  $region31: #{traj_estimator_threshold.1} parent=0 // pred_check_branch
    %29 = sbr.rel (0) target = $region33
  $region32: #{traj_estimator_threshold.1} parent=0 // pred_region
    _
  $region33: #{traj_estimator_threshold.1} parent=0 // pred_fallthru
    _
  // Predicated region
  $region34: #{traj_estimator_threshold.1} parent=0 // pred_check
    _
  $region35: #{traj_estimator_threshold.1} parent=0 // pred_check_branch
    %31 = sbr.rel (0) target = $region37
  $region36: #{traj_estimator_threshold.1} parent=0 // pred_region
    _
  $region37: #{traj_estimator_threshold.1} parent=0 // pred_fallthru
    _
  %v32 = vld [vmem:[%s0] sm:$0xff]
  %v33 = vld [vmem:[%s0 + $0x8] sm:$0xff]
  %v34 = vld [vmem:[%s0 + $0x10] sm:$0xff]
  %v35 = vld [vmem:[%s0 + $0x18] sm:$0xff]
  %v36 = vld [vmem:[%s0 + $0x20] sm:$0xff]
  %v37 = vld [vmem:[%s0 + $0x28] sm:$0xff]
  %v38 = vld [vmem:[%s0 + $0x30] sm:$0xff]
  %v39 = vld [vmem:[%s0 + $0x38] sm:$0xff]
  %v40 = vld [vmem:[%s3] sm:$0x3]
  %42 = vset.pattern.permute.xlu0 0
  %43 = vperm.xlu0 %42, %v32
  %v44 = vpop.permute.xlu0 %43
  %47 = vset.pattern.permute.xlu0 0
  %48 = vperm.xlu0 %47, %v33
  %v49 = vpop.permute.xlu0 %48
  %52 = vset.pattern.permute.xlu0 0
  %53 = vperm.xlu0 %52, %v34
  %v54 = vpop.permute.xlu0 %53
  %57 = vset.pattern.permute.xlu0 0
  %58 = vperm.xlu0 %57, %v35
  %v59 = vpop.permute.xlu0 %58
  %62 = vset.pattern.permute.xlu0 0
  %63 = vperm.xlu0 %62, %v36
  %v64 = vpop.permute.xlu0 %63
  %67 = vset.pattern.permute.xlu0 0
  %68 = vperm.xlu0 %67, %v37
  %v69 = vpop.permute.xlu0 %68
  %72 = vset.pattern.permute.xlu0 0
  %73 = vperm.xlu0 %72, %v38
  %v74 = vpop.permute.xlu0 %73
  %77 = vset.pattern.permute.xlu0 0
  %78 = vperm.xlu0 %77, %v39
  %v79 = vpop.permute.xlu0 %78
  %v81 = vlaneseq
  %v82 = vshrl.u32 %v81, 7
  %v83 = vsub.s32 0, %v82
  %v84 = vrot.slane %v40, %v83
  %v85 = vmul.f32 %v44, %v84
  %v86 = vmul.f32 %v49, %v84
  %v87 = vmul.f32 %v54, %v84
  %v88 = vmul.f32 %v59, %v84
  %v89 = vmul.f32 %v64, %v84
  %v90 = vmul.f32 %v69, %v84
  %v91 = vmul.f32 %v74, %v84
  %v92 = vmul.f32 %v79, %v84
  %93 = vset.pattern.permute.xlu0 1
  %94 = vperm.xlu0 %93, %v32
  %v95 = vpop.permute.xlu0 %94
  %97 = vset.pattern.permute.xlu0 1
  %98 = vperm.xlu0 %97, %v33
  %v99 = vpop.permute.xlu0 %98
  %101 = vset.pattern.permute.xlu0 1
  %102 = vperm.xlu0 %101, %v34
  %v103 = vpop.permute.xlu0 %102
  %105 = vset.pattern.permute.xlu0 1
  %106 = vperm.xlu0 %105, %v35
  %v107 = vpop.permute.xlu0 %106
  %109 = vset.pattern.permute.xlu0 1
  %110 = vperm.xlu0 %109, %v36
  %v111 = vpop.permute.xlu0 %110
  %113 = vset.pattern.permute.xlu0 1
  %114 = vperm.xlu0 %113, %v37
  %v115 = vpop.permute.xlu0 %114
  %117 = vset.pattern.permute.xlu0 1
  %118 = vperm.xlu0 %117, %v38
  %v119 = vpop.permute.xlu0 %118
  %121 = vset.pattern.permute.xlu0 1
  %122 = vperm.xlu0 %121, %v39
  %v123 = vpop.permute.xlu0 %122
  %v125 = vlaneseq
  %v126 = vshrl.u32 %v125, 7
  %v127 = vsub.s32 1, %v126
  %v128 = vrot.slane %v40, %v127
  %v129 = vmul.f32 %v95, %v128
  %v130 = vmul.f32 %v99, %v128
  %v131 = vmul.f32 %v103, %v128
  %v132 = vmul.f32 %v107, %v128
  %v133 = vmul.f32 %v111, %v128
  %v134 = vmul.f32 %v115, %v128
  %v135 = vmul.f32 %v119, %v128
  %v136 = vmul.f32 %v123, %v128
  %v137 = vadd.f32 %v85, %v129
  %v138 = vadd.f32 %v86, %v130
  %v139 = vadd.f32 %v87, %v131
  %v140 = vadd.f32 %v88, %v132
  %v141 = vadd.f32 %v89, %v133
  %v142 = vadd.f32 %v90, %v134
  %v143 = vadd.f32 %v91, %v135
  %v144 = vadd.f32 %v92, %v136
  %v145 = vld [vmem:[%s4] sm:$0x1]
  %v147 = vlaneseq
  %v148 = vshrl.u32 %v147, 7
  %v149 = vsub.s32 0, %v148
  %v150 = vrot.slane %v145, %v149
  %v152 = vadd.f32 %v137, %v150
  %v153 = vadd.f32 %v138, %v150
  %v154 = vadd.f32 %v139, %v150
  %v155 = vadd.f32 %v140, %v150
  %v156 = vadd.f32 %v141, %v150
  %v157 = vadd.f32 %v142, %v150
  %v158 = vadd.f32 %v143, %v150
  %v159 = vadd.f32 %v144, %v150
  %v160 = vlaneseq
  %v161 = vshrl.u32 %v160, 7
  %v162 = vadd.s32 %v161, 8
  %v163 = vadd.s32 %v161, 16
  %v164 = vadd.s32 %v161, 24
  %v165 = vadd.s32 %v161, 32
  %v166 = vadd.s32 %v161, 40
  %v167 = vadd.s32 %v161, 48
  %v168 = vadd.s32 %v161, 56
  %vm169 = vcmp.lt.s32.totalorder %v161, 8
  %vm170 = vcmp.lt.s32.totalorder %v162, 8
  %vm171 = vcmp.lt.s32.totalorder %v163, 8
  %vm172 = vcmp.lt.s32.totalorder %v164, 8
  %vm173 = vcmp.lt.s32.totalorder %v165, 8
  %vm174 = vcmp.lt.s32.totalorder %v166, 8
  %vm175 = vcmp.lt.s32.totalorder %v167, 8
  %vm176 = vcmp.lt.s32.totalorder %v168, 8
  %vm177 = vcmp.ge.s32.totalorder %v161, 56
  %vm178 = vcmp.ge.s32.totalorder %v162, 56
  %vm179 = vcmp.ge.s32.totalorder %v163, 56
  %vm180 = vcmp.ge.s32.totalorder %v164, 56
  %vm181 = vcmp.ge.s32.totalorder %v165, 56
  %vm182 = vcmp.ge.s32.totalorder %v166, 56
  %vm183 = vcmp.ge.s32.totalorder %v167, 56
  %vm184 = vcmp.ge.s32.totalorder %v168, 56
  %v185 = vld [vmem:[%s5] sm:$0xff]
  %v186 = vld [vmem:[%s5 + $0x8] sm:$0xff]
  %vm187 = vcmask 130048
  %v189 = vsel %vm187, %v152, 0
  %v192 = vsel %vm187, %v153, 0
  %v195 = vsel %vm187, %v154, 0
  %v198 = vsel %vm187, %v155, 0
  %v201 = vsel %vm187, %v156, 0
  %v204 = vsel %vm187, %v157, 0
  %v207 = vsel %vm187, %v158, 0
  %v210 = vsel %vm187, %v159, 0
  %212 = vmatprep.subr.mxu0 0.0
  %213 = vmatpush1.msra.mxu0 %v185
  %214 = vmatprep.subr.mxu0 0.0
  %215 = vmatpush1.msra.mxu0 %v186
  %216 = vmatprep.subr.mxu0 0.0
  %217 = vmatpush1.msra.mxu0 0.0
  %218 = vmatprep.subr.mxu0 0.0
  %219 = vmatpush1.msra.mxu0 0.0
  %220 = vmatprep.subr.mxu0 0.0
  %221 = vmatpush1.msra.mxu0 0.0
  %222 = vmatprep.subr.mxu0 0.0
  %223 = vmatpush1.msra.mxu0 0.0
  %224 = vmatprep.subr.mxu0 0.0
  %225 = vmatpush1.msra.mxu0 0.0
  %226 = vmatprep.subr.mxu0 0.0
  %227 = vmatpush1.msra.mxu0 0.0
  %228 = vmatprep.subr.mxu0 0.0
  %229 = vmatpush1.msra.mxu0 0.0
  %230 = vmatprep.subr.mxu0 0.0
  %231 = vmatpush1.msra.mxu0 0.0
  %232 = vmatprep.subr.mxu0 0.0
  %233 = vmatpush1.msra.mxu0 0.0
  %234 = vmatprep.subr.mxu0 0.0
  %235 = vmatpush1.msra.mxu0 0.0
  %236 = vmatprep.subr.mxu0 0.0
  %237 = vmatpush1.msra.mxu0 0.0
  %238 = vmatprep.subr.mxu0 0.0
  %239 = vmatpush1.msra.mxu0 0.0
  %240 = vmatprep.subr.mxu0 0.0
  %241 = vmatpush1.msra.mxu0 0.0
  %242 = vmatprep.subr.mxu0 0.0
  %243 = vmatpush1.msra.mxu0 0.0
  %244 = vmatprep.subr.mxu0 0.0
  %245 = vmatpush1.msra.mxu0 0.0
  %246 = vmatprep.subr.mxu0 0.0
  %247 = vmatpush1.msra.mxu0 0.0
  %248 = vmatprep.subr.mxu0 0.0
  %249 = vmatpush1.msra.mxu0 0.0
  %250 = vmatprep.subr.mxu0 0.0
  %251 = vmatpush1.msra.mxu0 0.0
  %252 = vmatprep.subr.mxu0 0.0
  %253 = vmatpush1.msra.mxu0 0.0
  %254 = vmatprep.subr.mxu0 0.0
  %255 = vmatpush1.msra.mxu0 0.0
  %256 = vmatprep.subr.mxu0 0.0
  %257 = vmatpush1.msra.mxu0 0.0
  %258 = vmatprep.subr.mxu0 0.0
  %259 = vmatpush1.msra.mxu0 0.0
  %260 = vmatprep.subr.mxu0 0.0
  %261 = vmatpush1.msra.mxu0 0.0
  %262 = vmatprep.subr.mxu0 0.0
  %263 = vmatpush1.msra.mxu0 0.0
  %264 = vmatprep.subr.mxu0 0.0
  %265 = vmatpush1.msra.mxu0 0.0
  %266 = vmatprep.subr.mxu0 0.0
  %267 = vmatpush1.msra.mxu0 0.0
  %268 = vmatprep.subr.mxu0 0.0
  %269 = vmatpush1.msra.mxu0 0.0
  %270 = vmatprep.subr.mxu0 0.0
  %271 = vmatpush1.msra.mxu0 0.0
  %272 = vmatprep.subr.mxu0 0.0
  %273 = vmatpush1.msra.mxu0 0.0
  %274 = vmatprep.subr.mxu0 0.0
  %275 = vmatpush1.msra.mxu0 0.0
  %276 = vmatprep.mubr.f32.mxu0 0.0
  %277 = vmatmul.mubr.f32.gmra.mrb[0].mxu0 %v189
  %v278 = vpop.f32.mrb[0].mxu0
  %v279 = vadd.f32 0.0, %v278
  %v280 = vpop.f32.mrb[0].mxu0
  %281 = vmatprep.mubr.f32.mxu0 0.0
  %282 = vmatmul.mubr.f32.gmra.mrb[0].mxu0 %v192
  %v283 = vpop.f32.mrb[0].mxu0
  %v284 = vadd.f32 0.0, %v283
  %v285 = vpop.f32.mrb[0].mxu0
  %286 = vmatprep.mubr.f32.mxu0 0.0
  %287 = vmatmul.mubr.f32.gmra.mrb[0].mxu0 %v195
  %v288 = vpop.f32.mrb[0].mxu0
  %v289 = vadd.f32 0.0, %v288
  %v290 = vpop.f32.mrb[0].mxu0
  %291 = vmatprep.mubr.f32.mxu0 0.0
  %292 = vmatmul.mubr.f32.gmra.mrb[0].mxu0 %v198
  %v293 = vpop.f32.mrb[0].mxu0
  %v294 = vadd.f32 0.0, %v293
  %v295 = vpop.f32.mrb[0].mxu0
  %296 = vmatprep.mubr.f32.mxu0 0.0
  %297 = vmatmul.mubr.f32.gmra.mrb[0].mxu0 %v201
  %v298 = vpop.f32.mrb[0].mxu0
  %v299 = vadd.f32 0.0, %v298
  %v300 = vpop.f32.mrb[0].mxu0
  %301 = vmatprep.mubr.f32.mxu0 0.0
  %302 = vmatmul.mubr.f32.gmra.mrb[0].mxu0 %v204
  %v303 = vpop.f32.mrb[0].mxu0
  %v304 = vadd.f32 0.0, %v303
  %v305 = vpop.f32.mrb[0].mxu0
  %306 = vmatprep.mubr.f32.mxu0 0.0
  %307 = vmatmul.mubr.f32.gmra.mrb[0].mxu0 %v207
  %v308 = vpop.f32.mrb[0].mxu0
  %v309 = vadd.f32 0.0, %v308
  %v310 = vpop.f32.mrb[0].mxu0
  %311 = vmatprep.mubr.f32.mxu0 0.0
  %312 = vmatmul.mubr.f32.gmra.mrb[0].mxu0 %v210
  %v313 = vpop.f32.mrb[0].mxu0
  %v314 = vadd.f32 0.0, %v313
  %v315 = vpop.f32.mrb[0].mxu0
  %316 = vdwg.mxu0
  %v317 = vsel %vm169, 1, 0
  %v318 = vsel %vm170, 1, 0
  %v319 = vsel %vm171, 1, 0
  %v320 = vsel %vm172, 1, 0
  %v321 = vsel %vm173, 1, 0
  %v322 = vsel %vm174, 1, 0
  %v323 = vsel %vm175, 1, 0
  %v324 = vsel %vm176, 1, 0
  %vm325 = vcmp.eq.s32.totalorder %v317, 1
  %vm326 = vcmp.eq.s32.totalorder %v318, 1
  %vm327 = vcmp.eq.s32.totalorder %v319, 1
  %vm328 = vcmp.eq.s32.totalorder %v320, 1
  %vm329 = vcmp.eq.s32.totalorder %v321, 1
  %vm330 = vcmp.eq.s32.totalorder %v322, 1
  %vm331 = vcmp.eq.s32.totalorder %v323, 1
  %vm332 = vcmp.eq.s32.totalorder %v324, 1
  %v333 = vsel %vm325, 0.0, %v314
  %v334 = vsel %vm326, 0.0, %v279
  %v335 = vsel %vm327, 0.0, %v284
  %v336 = vsel %vm328, 0.0, %v289
  %v337 = vsel %vm329, 0.0, %v294
  %v338 = vsel %vm330, 0.0, %v299
  %v339 = vsel %vm331, 0.0, %v304
  %v340 = vsel %vm332, 0.0, %v309
  %349 = vrot.lane.b32.xlu0 %v279, 96
  %v350 = vpop.permute.xlu0 %349
  %351 = vrot.lane.b32.xlu0 %v284, 96
  %v352 = vpop.permute.xlu0 %351
  %353 = vrot.lane.b32.xlu0 %v289, 96
  %v354 = vpop.permute.xlu0 %353
  %355 = vrot.lane.b32.xlu0 %v294, 96
  %v356 = vpop.permute.xlu0 %355
  %357 = vrot.lane.b32.xlu0 %v299, 96
  %v358 = vpop.permute.xlu0 %357
  %359 = vrot.lane.b32.xlu0 %v304, 96
  %v360 = vpop.permute.xlu0 %359
  %361 = vrot.lane.b32.xlu0 %v309, 96
  %v362 = vpop.permute.xlu0 %361
  %363 = vrot.lane.b32.xlu0 %v314, 96
  %v364 = vpop.permute.xlu0 %363
  %v373 = vsel %vm177, 1, 0
  %v374 = vsel %vm178, 1, 0
  %v375 = vsel %vm179, 1, 0
  %v376 = vsel %vm180, 1, 0
  %v377 = vsel %vm181, 1, 0
  %v378 = vsel %vm182, 1, 0
  %v379 = vsel %vm183, 1, 0
  %v380 = vsel %vm184, 1, 0
  %vm381 = vcmp.eq.s32.totalorder %v373, 1
  %vm382 = vcmp.eq.s32.totalorder %v374, 1
  %vm383 = vcmp.eq.s32.totalorder %v375, 1
  %vm384 = vcmp.eq.s32.totalorder %v376, 1
  %vm385 = vcmp.eq.s32.totalorder %v377, 1
  %vm386 = vcmp.eq.s32.totalorder %v378, 1
  %vm387 = vcmp.eq.s32.totalorder %v379, 1
  %vm388 = vcmp.eq.s32.totalorder %v380, 1
  %v389 = vsel %vm381, 0.0, %v352
  %v390 = vsel %vm382, 0.0, %v354
  %v391 = vsel %vm383, 0.0, %v356
  %v392 = vsel %vm384, 0.0, %v358
  %v393 = vsel %vm385, 0.0, %v360
  %v394 = vsel %vm386, 0.0, %v362
  %v395 = vsel %vm387, 0.0, %v364
  %v396 = vsel %vm388, 0.0, %v350
  %405 = vrot.lane.b32.xlu0 %v333, 16
  %v406 = vpop.permute.xlu0 %405
  %407 = vrot.lane.b32.xlu0 %v334, 16
  %v408 = vpop.permute.xlu0 %407
  %409 = vrot.lane.b32.xlu0 %v335, 16
  %v410 = vpop.permute.xlu0 %409
  %411 = vrot.lane.b32.xlu0 %v336, 16
  %v412 = vpop.permute.xlu0 %411
  %413 = vrot.lane.b32.xlu0 %v337, 16
  %v414 = vpop.permute.xlu0 %413
  %415 = vrot.lane.b32.xlu0 %v338, 16
  %v416 = vpop.permute.xlu0 %415
  %417 = vrot.lane.b32.xlu0 %v339, 16
  %v418 = vpop.permute.xlu0 %417
  %419 = vrot.lane.b32.xlu0 %v340, 16
  %v420 = vpop.permute.xlu0 %419
  %v429 = vadd.f32 %v279, %v406
  %v430 = vadd.f32 %v284, %v408
  %v431 = vadd.f32 %v289, %v410
  %v432 = vadd.f32 %v294, %v412
  %v433 = vadd.f32 %v299, %v414
  %v434 = vadd.f32 %v304, %v416
  %v435 = vadd.f32 %v309, %v418
  %v436 = vadd.f32 %v314, %v420
  %445 = vrot.lane.b32.xlu0 %v389, 16
  %v446 = vpop.permute.xlu0 %445
  %447 = vrot.lane.b32.xlu0 %v390, 16
  %v448 = vpop.permute.xlu0 %447
  %449 = vrot.lane.b32.xlu0 %v391, 16
  %v450 = vpop.permute.xlu0 %449
  %451 = vrot.lane.b32.xlu0 %v392, 16
  %v452 = vpop.permute.xlu0 %451
  %453 = vrot.lane.b32.xlu0 %v393, 16
  %v454 = vpop.permute.xlu0 %453
  %455 = vrot.lane.b32.xlu0 %v394, 16
  %v456 = vpop.permute.xlu0 %455
  %457 = vrot.lane.b32.xlu0 %v395, 16
  %v458 = vpop.permute.xlu0 %457
  %459 = vrot.lane.b32.xlu0 %v396, 16
  %v460 = vpop.permute.xlu0 %459
  %v469 = vadd.f32 %v429, %v446
  %v470 = vadd.f32 %v430, %v448
  %v471 = vadd.f32 %v431, %v450
  %v472 = vadd.f32 %v432, %v452
  %v473 = vadd.f32 %v433, %v454
  %v474 = vadd.f32 %v434, %v456
  %v475 = vadd.f32 %v435, %v458
  %v476 = vadd.f32 %v436, %v460
  %v477 = vld [vmem:[%s6] sm:$0x1]
  %v479 = vlaneseq
  %v480 = vshrl.u32 %v479, 7
  %v481 = vsub.s32 0, %v480
  %v482 = vrot.slane %v477, %v481
  %483 = vrot.lane.b32.xlu0 %v482, 16
  %v484 = vpop.permute.xlu0 %483
  %v486 = vadd.f32 %v469, %v484
  %v487 = vadd.f32 %v470, %v484
  %v488 = vadd.f32 %v471, %v484
  %v489 = vadd.f32 %v472, %v484
  %v490 = vadd.f32 %v473, %v484
  %v491 = vadd.f32 %v474, %v484
  %v492 = vadd.f32 %v475, %v484
  %v493 = vadd.f32 %v476, %v484
  %v494 = vmax.f32 %v486, 0.0
  %v495 = vmax.f32 %v487, 0.0
  %v496 = vmax.f32 %v488, 0.0
  %v497 = vmax.f32 %v489, 0.0
  %v498 = vmax.f32 %v490, 0.0
  %v499 = vmax.f32 %v491, 0.0
  %v500 = vmax.f32 %v492, 0.0
  %v501 = vmax.f32 %v493, 0.0
  %s502 = scalar_lea.vmem %s5, 16
  %v503 = vld [vmem:[%s502] sm:$0xff]
  %v504 = vld [vmem:[%s502 + $0x8] sm:$0xff]
  %513 = vrot.lane.b32.xlu0 %v494, 112
  %v514 = vpop.permute.xlu0 %513
  %515 = vrot.lane.b32.xlu0 %v495, 112
  %v516 = vpop.permute.xlu0 %515
  %517 = vrot.lane.b32.xlu0 %v496, 112
  %v518 = vpop.permute.xlu0 %517
  %519 = vrot.lane.b32.xlu0 %v497, 112
  %v520 = vpop.permute.xlu0 %519
  %521 = vrot.lane.b32.xlu0 %v498, 112
  %v522 = vpop.permute.xlu0 %521
  %523 = vrot.lane.b32.xlu0 %v499, 112
  %v524 = vpop.permute.xlu0 %523
  %525 = vrot.lane.b32.xlu0 %v500, 112
  %v526 = vpop.permute.xlu0 %525
  %527 = vrot.lane.b32.xlu0 %v501, 112
  %v528 = vpop.permute.xlu0 %527
  %v529 = vsel %vm187, %v514, 0
  %v531 = vsel %vm187, %v516, 0
  %v533 = vsel %vm187, %v518, 0
  %v535 = vsel %vm187, %v520, 0
  %v537 = vsel %vm187, %v522, 0
  %v539 = vsel %vm187, %v524, 0
  %v541 = vsel %vm187, %v526, 0
  %v543 = vsel %vm187, %v528, 0
  %545 = vmatprep.subr.mxu0 0.0
  %546 = vmatpush1.msra.mxu0 %v503
  %547 = vmatprep.subr.mxu0 0.0
  %548 = vmatpush1.msra.mxu0 %v504
  %549 = vmatprep.subr.mxu0 0.0
  %550 = vmatpush1.msra.mxu0 0.0
  %551 = vmatprep.subr.mxu0 0.0
  %552 = vmatpush1.msra.mxu0 0.0
  %553 = vmatprep.subr.mxu0 0.0
  %554 = vmatpush1.msra.mxu0 0.0
  %555 = vmatprep.subr.mxu0 0.0
  %556 = vmatpush1.msra.mxu0 0.0
  %557 = vmatprep.subr.mxu0 0.0
  %558 = vmatpush1.msra.mxu0 0.0
  %559 = vmatprep.subr.mxu0 0.0
  %560 = vmatpush1.msra.mxu0 0.0
  %561 = vmatprep.subr.mxu0 0.0
  %562 = vmatpush1.msra.mxu0 0.0
  %563 = vmatprep.subr.mxu0 0.0
  %564 = vmatpush1.msra.mxu0 0.0
  %565 = vmatprep.subr.mxu0 0.0
  %566 = vmatpush1.msra.mxu0 0.0
  %567 = vmatprep.subr.mxu0 0.0
  %568 = vmatpush1.msra.mxu0 0.0
  %569 = vmatprep.subr.mxu0 0.0
  %570 = vmatpush1.msra.mxu0 0.0
  %571 = vmatprep.subr.mxu0 0.0
  %572 = vmatpush1.msra.mxu0 0.0
  %573 = vmatprep.subr.mxu0 0.0
  %574 = vmatpush1.msra.mxu0 0.0
  %575 = vmatprep.subr.mxu0 0.0
  %576 = vmatpush1.msra.mxu0 0.0
  %577 = vmatprep.subr.mxu0 0.0
  %578 = vmatpush1.msra.mxu0 0.0
  %579 = vmatprep.subr.mxu0 0.0
  %580 = vmatpush1.msra.mxu0 0.0
  %581 = vmatprep.subr.mxu0 0.0
  %582 = vmatpush1.msra.mxu0 0.0
  %583 = vmatprep.subr.mxu0 0.0
  %584 = vmatpush1.msra.mxu0 0.0
  %585 = vmatprep.subr.mxu0 0.0
  %586 = vmatpush1.msra.mxu0 0.0
  %587 = vmatprep.subr.mxu0 0.0
  %588 = vmatpush1.msra.mxu0 0.0
  %589 = vmatprep.subr.mxu0 0.0
  %590 = vmatpush1.msra.mxu0 0.0
  %591 = vmatprep.subr.mxu0 0.0
  %592 = vmatpush1.msra.mxu0 0.0
  %593 = vmatprep.subr.mxu0 0.0
  %594 = vmatpush1.msra.mxu0 0.0
  %595 = vmatprep.subr.mxu0 0.0
  %596 = vmatpush1.msra.mxu0 0.0
  %597 = vmatprep.subr.mxu0 0.0
  %598 = vmatpush1.msra.mxu0 0.0
  %599 = vmatprep.subr.mxu0 0.0
  %600 = vmatpush1.msra.mxu0 0.0
  %601 = vmatprep.subr.mxu0 0.0
  %602 = vmatpush1.msra.mxu0 0.0
  %603 = vmatprep.subr.mxu0 0.0
  %604 = vmatpush1.msra.mxu0 0.0
  %605 = vmatprep.subr.mxu0 0.0
  %606 = vmatpush1.msra.mxu0 0.0
  %607 = vmatprep.subr.mxu0 0.0
  %608 = vmatpush1.msra.mxu0 0.0
  %609 = vmatprep.mubr.f32.mxu0 0.0
  %610 = vmatmul.mubr.f32.gmra.mrb[0].mxu0 %v529
  %v611 = vpop.f32.mrb[0].mxu0
  %v612 = vadd.f32 0.0, %v611
  %v613 = vpop.f32.mrb[0].mxu0
  %614 = vmatprep.mubr.f32.mxu0 0.0
  %615 = vmatmul.mubr.f32.gmra.mrb[0].mxu0 %v531
  %v616 = vpop.f32.mrb[0].mxu0
  %v617 = vadd.f32 0.0, %v616
  %v618 = vpop.f32.mrb[0].mxu0
  %619 = vmatprep.mubr.f32.mxu0 0.0
  %620 = vmatmul.mubr.f32.gmra.mrb[0].mxu0 %v533
  %v621 = vpop.f32.mrb[0].mxu0
  %v622 = vadd.f32 0.0, %v621
  %v623 = vpop.f32.mrb[0].mxu0
  %624 = vmatprep.mubr.f32.mxu0 0.0
  %625 = vmatmul.mubr.f32.gmra.mrb[0].mxu0 %v535
  %v626 = vpop.f32.mrb[0].mxu0
  %v627 = vadd.f32 0.0, %v626
  %v628 = vpop.f32.mrb[0].mxu0
  %629 = vmatprep.mubr.f32.mxu0 0.0
  %630 = vmatmul.mubr.f32.gmra.mrb[0].mxu0 %v537
  %v631 = vpop.f32.mrb[0].mxu0
  %v632 = vadd.f32 0.0, %v631
  %v633 = vpop.f32.mrb[0].mxu0
  %634 = vmatprep.mubr.f32.mxu0 0.0
  %635 = vmatmul.mubr.f32.gmra.mrb[0].mxu0 %v539
  %v636 = vpop.f32.mrb[0].mxu0
  %v637 = vadd.f32 0.0, %v636
  %v638 = vpop.f32.mrb[0].mxu0
  %639 = vmatprep.mubr.f32.mxu0 0.0
  %640 = vmatmul.mubr.f32.gmra.mrb[0].mxu0 %v541
  %v641 = vpop.f32.mrb[0].mxu0
  %v642 = vadd.f32 0.0, %v641
  %v643 = vpop.f32.mrb[0].mxu0
  %644 = vmatprep.mubr.f32.mxu0 0.0
  %645 = vmatmul.mubr.f32.gmra.mrb[0].mxu0 %v543
  %v646 = vpop.f32.mrb[0].mxu0
  %v647 = vadd.f32 0.0, %v646
  %v648 = vpop.f32.mrb[0].mxu0
  %649 = vdwg.mxu0
  %v650 = vsel %vm325, 0.0, %v647
  %v651 = vsel %vm326, 0.0, %v612
  %v652 = vsel %vm327, 0.0, %v617
  %v653 = vsel %vm328, 0.0, %v622
  %v654 = vsel %vm329, 0.0, %v627
  %v655 = vsel %vm330, 0.0, %v632
  %v656 = vsel %vm331, 0.0, %v637
  %v657 = vsel %vm332, 0.0, %v642
  %666 = vrot.lane.b32.xlu0 %v612, 96
  %v667 = vpop.permute.xlu0 %666
  %668 = vrot.lane.b32.xlu0 %v617, 96
  %v669 = vpop.permute.xlu0 %668
  %670 = vrot.lane.b32.xlu0 %v622, 96
  %v671 = vpop.permute.xlu0 %670
  %672 = vrot.lane.b32.xlu0 %v627, 96
  %v673 = vpop.permute.xlu0 %672
  %674 = vrot.lane.b32.xlu0 %v632, 96
  %v675 = vpop.permute.xlu0 %674
  %676 = vrot.lane.b32.xlu0 %v637, 96
  %v677 = vpop.permute.xlu0 %676
  %678 = vrot.lane.b32.xlu0 %v642, 96
  %v679 = vpop.permute.xlu0 %678
  %680 = vrot.lane.b32.xlu0 %v647, 96
  %v681 = vpop.permute.xlu0 %680
  %v690 = vsel %vm381, 0.0, %v669
  %v691 = vsel %vm382, 0.0, %v671
  %v692 = vsel %vm383, 0.0, %v673
  %v693 = vsel %vm384, 0.0, %v675
  %v694 = vsel %vm385, 0.0, %v677
  %v695 = vsel %vm386, 0.0, %v679
  %v696 = vsel %vm387, 0.0, %v681
  %v697 = vsel %vm388, 0.0, %v667
  %706 = vrot.lane.b32.xlu0 %v650, 16
  %v707 = vpop.permute.xlu0 %706
  %708 = vrot.lane.b32.xlu0 %v651, 16
  %v709 = vpop.permute.xlu0 %708
  %710 = vrot.lane.b32.xlu0 %v652, 16
  %v711 = vpop.permute.xlu0 %710
  %712 = vrot.lane.b32.xlu0 %v653, 16
  %v713 = vpop.permute.xlu0 %712
  %714 = vrot.lane.b32.xlu0 %v654, 16
  %v715 = vpop.permute.xlu0 %714
  %716 = vrot.lane.b32.xlu0 %v655, 16
  %v717 = vpop.permute.xlu0 %716
  %718 = vrot.lane.b32.xlu0 %v656, 16
  %v719 = vpop.permute.xlu0 %718
  %720 = vrot.lane.b32.xlu0 %v657, 16
  %v721 = vpop.permute.xlu0 %720
  %v730 = vadd.f32 %v612, %v707
  %v731 = vadd.f32 %v617, %v709
  %v732 = vadd.f32 %v622, %v711
  %v733 = vadd.f32 %v627, %v713
  %v734 = vadd.f32 %v632, %v715
  %v735 = vadd.f32 %v637, %v717
  %v736 = vadd.f32 %v642, %v719
  %v737 = vadd.f32 %v647, %v721
  %746 = vrot.lane.b32.xlu0 %v690, 16
  %v747 = vpop.permute.xlu0 %746
  %748 = vrot.lane.b32.xlu0 %v691, 16
  %v749 = vpop.permute.xlu0 %748
  %750 = vrot.lane.b32.xlu0 %v692, 16
  %v751 = vpop.permute.xlu0 %750
  %752 = vrot.lane.b32.xlu0 %v693, 16
  %v753 = vpop.permute.xlu0 %752
  %754 = vrot.lane.b32.xlu0 %v694, 16
  %v755 = vpop.permute.xlu0 %754
  %756 = vrot.lane.b32.xlu0 %v695, 16
  %v757 = vpop.permute.xlu0 %756
  %758 = vrot.lane.b32.xlu0 %v696, 16
  %v759 = vpop.permute.xlu0 %758
  %760 = vrot.lane.b32.xlu0 %v697, 16
  %v761 = vpop.permute.xlu0 %760
  %v770 = vadd.f32 %v730, %v747
  %v771 = vadd.f32 %v731, %v749
  %v772 = vadd.f32 %v732, %v751
  %v773 = vadd.f32 %v733, %v753
  %v774 = vadd.f32 %v734, %v755
  %v775 = vadd.f32 %v735, %v757
  %v776 = vadd.f32 %v736, %v759
  %v777 = vadd.f32 %v737, %v761
  %s778 = scalar_lea.vmem %s6, 1
  %v779 = vld [vmem:[%s778] sm:$0x1]
  %v781 = vlaneseq
  %v782 = vshrl.u32 %v781, 7
  %v783 = vsub.s32 0, %v782
  %v784 = vrot.slane %v779, %v783
  %785 = vrot.lane.b32.xlu0 %v784, 16
  %v786 = vpop.permute.xlu0 %785
  %v788 = vadd.f32 %v770, %v786
  %v789 = vadd.f32 %v771, %v786
  %v790 = vadd.f32 %v772, %v786
  %v791 = vadd.f32 %v773, %v786
  %v792 = vadd.f32 %v774, %v786
  %v793 = vadd.f32 %v775, %v786
  %v794 = vadd.f32 %v776, %v786
  %v795 = vadd.f32 %v777, %v786
  %v796 = vmax.f32 %v788, 0.0
  %v797 = vmax.f32 %v789, 0.0
  %v798 = vmax.f32 %v790, 0.0
  %v799 = vmax.f32 %v791, 0.0
  %v800 = vmax.f32 %v792, 0.0
  %v801 = vmax.f32 %v793, 0.0
  %v802 = vmax.f32 %v794, 0.0
  %v803 = vmax.f32 %v795, 0.0
  %s804 = scalar_lea.vmem %s5, 32
  %v805 = vld [vmem:[%s804] sm:$0xff]
  %v806 = vld [vmem:[%s804 + $0x8] sm:$0xff]
  %815 = vrot.lane.b32.xlu0 %v796, 112
  %v816 = vpop.permute.xlu0 %815
  %817 = vrot.lane.b32.xlu0 %v797, 112
  %v818 = vpop.permute.xlu0 %817
  %819 = vrot.lane.b32.xlu0 %v798, 112
  %v820 = vpop.permute.xlu0 %819
  %821 = vrot.lane.b32.xlu0 %v799, 112
  %v822 = vpop.permute.xlu0 %821
  %823 = vrot.lane.b32.xlu0 %v800, 112
  %v824 = vpop.permute.xlu0 %823
  %825 = vrot.lane.b32.xlu0 %v801, 112
  %v826 = vpop.permute.xlu0 %825
  %827 = vrot.lane.b32.xlu0 %v802, 112
  %v828 = vpop.permute.xlu0 %827
  %829 = vrot.lane.b32.xlu0 %v803, 112
  %v830 = vpop.permute.xlu0 %829
  %v831 = vsel %vm187, %v816, 0
  %v833 = vsel %vm187, %v818, 0
  %v835 = vsel %vm187, %v820, 0
  %v837 = vsel %vm187, %v822, 0
  %v839 = vsel %vm187, %v824, 0
  %v841 = vsel %vm187, %v826, 0
  %v843 = vsel %vm187, %v828, 0
  %v845 = vsel %vm187, %v830, 0
  %847 = vmatprep.subr.mxu0 0.0
  %848 = vmatpush1.msra.mxu0 %v805
  %849 = vmatprep.subr.mxu0 0.0
  %850 = vmatpush1.msra.mxu0 %v806
  %851 = vmatprep.subr.mxu0 0.0
  %852 = vmatpush1.msra.mxu0 0.0
  %853 = vmatprep.subr.mxu0 0.0
  %854 = vmatpush1.msra.mxu0 0.0
  %855 = vmatprep.subr.mxu0 0.0
  %856 = vmatpush1.msra.mxu0 0.0
  %857 = vmatprep.subr.mxu0 0.0
  %858 = vmatpush1.msra.mxu0 0.0
  %859 = vmatprep.subr.mxu0 0.0
  %860 = vmatpush1.msra.mxu0 0.0
  %861 = vmatprep.subr.mxu0 0.0
  %862 = vmatpush1.msra.mxu0 0.0
  %863 = vmatprep.subr.mxu0 0.0
  %864 = vmatpush1.msra.mxu0 0.0
  %865 = vmatprep.subr.mxu0 0.0
  %866 = vmatpush1.msra.mxu0 0.0
  %867 = vmatprep.subr.mxu0 0.0
  %868 = vmatpush1.msra.mxu0 0.0
  %869 = vmatprep.subr.mxu0 0.0
  %870 = vmatpush1.msra.mxu0 0.0
  %871 = vmatprep.subr.mxu0 0.0
  %872 = vmatpush1.msra.mxu0 0.0
  %873 = vmatprep.subr.mxu0 0.0
  %874 = vmatpush1.msra.mxu0 0.0
  %875 = vmatprep.subr.mxu0 0.0
  %876 = vmatpush1.msra.mxu0 0.0
  %877 = vmatprep.subr.mxu0 0.0
  %878 = vmatpush1.msra.mxu0 0.0
  %879 = vmatprep.subr.mxu0 0.0
  %880 = vmatpush1.msra.mxu0 0.0
  %881 = vmatprep.subr.mxu0 0.0
  %882 = vmatpush1.msra.mxu0 0.0
  %883 = vmatprep.subr.mxu0 0.0
  %884 = vmatpush1.msra.mxu0 0.0
  %885 = vmatprep.subr.mxu0 0.0
  %886 = vmatpush1.msra.mxu0 0.0
  %887 = vmatprep.subr.mxu0 0.0
  %888 = vmatpush1.msra.mxu0 0.0
  %889 = vmatprep.subr.mxu0 0.0
  %890 = vmatpush1.msra.mxu0 0.0
  %891 = vmatprep.subr.mxu0 0.0
  %892 = vmatpush1.msra.mxu0 0.0
  %893 = vmatprep.subr.mxu0 0.0
  %894 = vmatpush1.msra.mxu0 0.0
  %895 = vmatprep.subr.mxu0 0.0
  %896 = vmatpush1.msra.mxu0 0.0
  %897 = vmatprep.subr.mxu0 0.0
  %898 = vmatpush1.msra.mxu0 0.0
  %899 = vmatprep.subr.mxu0 0.0
  %900 = vmatpush1.msra.mxu0 0.0
  %901 = vmatprep.subr.mxu0 0.0
  %902 = vmatpush1.msra.mxu0 0.0
  %903 = vmatprep.subr.mxu0 0.0
  %904 = vmatpush1.msra.mxu0 0.0
  %905 = vmatprep.subr.mxu0 0.0
  %906 = vmatpush1.msra.mxu0 0.0
  %907 = vmatprep.subr.mxu0 0.0
  %908 = vmatpush1.msra.mxu0 0.0
  %909 = vmatprep.subr.mxu0 0.0
  %910 = vmatpush1.msra.mxu0 0.0
  %911 = vmatprep.mubr.f32.mxu0 0.0
  %912 = vmatmul.mubr.f32.gmra.mrb[0].mxu0 %v831
  %v913 = vpop.f32.mrb[0].mxu0
  %v914 = vadd.f32 0.0, %v913
  %v915 = vpop.f32.mrb[0].mxu0
  %916 = vmatprep.mubr.f32.mxu0 0.0
  %917 = vmatmul.mubr.f32.gmra.mrb[0].mxu0 %v833
  %v918 = vpop.f32.mrb[0].mxu0
  %v919 = vadd.f32 0.0, %v918
  %v920 = vpop.f32.mrb[0].mxu0
  %921 = vmatprep.mubr.f32.mxu0 0.0
  %922 = vmatmul.mubr.f32.gmra.mrb[0].mxu0 %v835
  %v923 = vpop.f32.mrb[0].mxu0
  %v924 = vadd.f32 0.0, %v923
  %v925 = vpop.f32.mrb[0].mxu0
  %926 = vmatprep.mubr.f32.mxu0 0.0
  %927 = vmatmul.mubr.f32.gmra.mrb[0].mxu0 %v837
  %v928 = vpop.f32.mrb[0].mxu0
  %v929 = vadd.f32 0.0, %v928
  %v930 = vpop.f32.mrb[0].mxu0
  %931 = vmatprep.mubr.f32.mxu0 0.0
  %932 = vmatmul.mubr.f32.gmra.mrb[0].mxu0 %v839
  %v933 = vpop.f32.mrb[0].mxu0
  %v934 = vadd.f32 0.0, %v933
  %v935 = vpop.f32.mrb[0].mxu0
  %936 = vmatprep.mubr.f32.mxu0 0.0
  %937 = vmatmul.mubr.f32.gmra.mrb[0].mxu0 %v841
  %v938 = vpop.f32.mrb[0].mxu0
  %v939 = vadd.f32 0.0, %v938
  %v940 = vpop.f32.mrb[0].mxu0
  %941 = vmatprep.mubr.f32.mxu0 0.0
  %942 = vmatmul.mubr.f32.gmra.mrb[0].mxu0 %v843
  %v943 = vpop.f32.mrb[0].mxu0
  %v944 = vadd.f32 0.0, %v943
  %v945 = vpop.f32.mrb[0].mxu0
  %946 = vmatprep.mubr.f32.mxu0 0.0
  %947 = vmatmul.mubr.f32.gmra.mrb[0].mxu0 %v845
  %v948 = vpop.f32.mrb[0].mxu0
  %v949 = vadd.f32 0.0, %v948
  %v950 = vpop.f32.mrb[0].mxu0
  %951 = vdwg.mxu0
  %v952 = vsel %vm325, 0.0, %v949
  %v953 = vsel %vm326, 0.0, %v914
  %v954 = vsel %vm327, 0.0, %v919
  %v955 = vsel %vm328, 0.0, %v924
  %v956 = vsel %vm329, 0.0, %v929
  %v957 = vsel %vm330, 0.0, %v934
  %v958 = vsel %vm331, 0.0, %v939
  %v959 = vsel %vm332, 0.0, %v944
  %968 = vrot.lane.b32.xlu0 %v914, 96
  %v969 = vpop.permute.xlu0 %968
  %970 = vrot.lane.b32.xlu0 %v919, 96
  %v971 = vpop.permute.xlu0 %970
  %972 = vrot.lane.b32.xlu0 %v924, 96
  %v973 = vpop.permute.xlu0 %972
  %974 = vrot.lane.b32.xlu0 %v929, 96
  %v975 = vpop.permute.xlu0 %974
  %976 = vrot.lane.b32.xlu0 %v934, 96
  %v977 = vpop.permute.xlu0 %976
  %978 = vrot.lane.b32.xlu0 %v939, 96
  %v979 = vpop.permute.xlu0 %978
  %980 = vrot.lane.b32.xlu0 %v944, 96
  %v981 = vpop.permute.xlu0 %980
  %982 = vrot.lane.b32.xlu0 %v949, 96
  %v983 = vpop.permute.xlu0 %982
  %v992 = vsel %vm381, 0.0, %v971
  %v993 = vsel %vm382, 0.0, %v973
  %v994 = vsel %vm383, 0.0, %v975
  %v995 = vsel %vm384, 0.0, %v977
  %v996 = vsel %vm385, 0.0, %v979
  %v997 = vsel %vm386, 0.0, %v981
  %v998 = vsel %vm387, 0.0, %v983
  %v999 = vsel %vm388, 0.0, %v969
  %1008 = vrot.lane.b32.xlu0 %v952, 16
  %v1009 = vpop.permute.xlu0 %1008
  %1010 = vrot.lane.b32.xlu0 %v953, 16
  %v1011 = vpop.permute.xlu0 %1010
  %1012 = vrot.lane.b32.xlu0 %v954, 16
  %v1013 = vpop.permute.xlu0 %1012
  %1014 = vrot.lane.b32.xlu0 %v955, 16
  %v1015 = vpop.permute.xlu0 %1014
  %1016 = vrot.lane.b32.xlu0 %v956, 16
  %v1017 = vpop.permute.xlu0 %1016
  %1018 = vrot.lane.b32.xlu0 %v957, 16
  %v1019 = vpop.permute.xlu0 %1018
  %1020 = vrot.lane.b32.xlu0 %v958, 16
  %v1021 = vpop.permute.xlu0 %1020
  %1022 = vrot.lane.b32.xlu0 %v959, 16
  %v1023 = vpop.permute.xlu0 %1022
  %v1032 = vadd.f32 %v914, %v1009
  %v1033 = vadd.f32 %v919, %v1011
  %v1034 = vadd.f32 %v924, %v1013
  %v1035 = vadd.f32 %v929, %v1015
  %v1036 = vadd.f32 %v934, %v1017
  %v1037 = vadd.f32 %v939, %v1019
  %v1038 = vadd.f32 %v944, %v1021
  %v1039 = vadd.f32 %v949, %v1023
  %1048 = vrot.lane.b32.xlu0 %v992, 16
  %v1049 = vpop.permute.xlu0 %1048
  %1050 = vrot.lane.b32.xlu0 %v993, 16
  %v1051 = vpop.permute.xlu0 %1050
  %1052 = vrot.lane.b32.xlu0 %v994, 16
  %v1053 = vpop.permute.xlu0 %1052
  %1054 = vrot.lane.b32.xlu0 %v995, 16
  %v1055 = vpop.permute.xlu0 %1054
  %1056 = vrot.lane.b32.xlu0 %v996, 16
  %v1057 = vpop.permute.xlu0 %1056
  %1058 = vrot.lane.b32.xlu0 %v997, 16
  %v1059 = vpop.permute.xlu0 %1058
  %1060 = vrot.lane.b32.xlu0 %v998, 16
  %v1061 = vpop.permute.xlu0 %1060
  %1062 = vrot.lane.b32.xlu0 %v999, 16
  %v1063 = vpop.permute.xlu0 %1062
  %v1072 = vadd.f32 %v1032, %v1049
  %v1073 = vadd.f32 %v1033, %v1051
  %v1074 = vadd.f32 %v1034, %v1053
  %v1075 = vadd.f32 %v1035, %v1055
  %v1076 = vadd.f32 %v1036, %v1057
  %v1077 = vadd.f32 %v1037, %v1059
  %v1078 = vadd.f32 %v1038, %v1061
  %v1079 = vadd.f32 %v1039, %v1063
  %s1080 = scalar_lea.vmem %s6, 2
  %v1081 = vld [vmem:[%s1080] sm:$0x1]
  %v1083 = vlaneseq
  %v1084 = vshrl.u32 %v1083, 7
  %v1085 = vsub.s32 0, %v1084
  %v1086 = vrot.slane %v1081, %v1085
  %1087 = vrot.lane.b32.xlu0 %v1086, 16
  %v1088 = vpop.permute.xlu0 %1087
  %v1090 = vadd.f32 %v1072, %v1088
  %v1091 = vadd.f32 %v1073, %v1088
  %v1092 = vadd.f32 %v1074, %v1088
  %v1093 = vadd.f32 %v1075, %v1088
  %v1094 = vadd.f32 %v1076, %v1088
  %v1095 = vadd.f32 %v1077, %v1088
  %v1096 = vadd.f32 %v1078, %v1088
  %v1097 = vadd.f32 %v1079, %v1088
  %v1098 = vmax.f32 %v1090, 0.0
  %v1099 = vmax.f32 %v1091, 0.0
  %v1100 = vmax.f32 %v1092, 0.0
  %v1101 = vmax.f32 %v1093, 0.0
  %v1102 = vmax.f32 %v1094, 0.0
  %v1103 = vmax.f32 %v1095, 0.0
  %v1104 = vmax.f32 %v1096, 0.0
  %v1105 = vmax.f32 %v1097, 0.0
  %v1106 = vld [vmem:[%s8] sm:$0x1]
  %v1108 = vlaneseq
  %v1109 = vshrl.u32 %v1108, 7
  %v1110 = vsub.s32 0, %v1109
  %v1111 = vrot.slane %v1106, %v1110
  %v1113 = vadd.f32 %v1111, 0.0
  %v1114 = vld [vmem:[%s7] sm:$0xff]
  %v1115 = vld [vmem:[%s7 + $0x8] sm:$0xff]
  %1117 = vrot.lane.b32.xlu0 %v1098, 112
  %v1118 = vpop.permute.xlu0 %1117
  %v1119 = vsel %vm187, %v1118, 0
  %1121 = vmatprep.subr.mxu0 0.0
  %1122 = vmatpush1.msra.mxu0 %v1114
  %1123 = vmatprep.subr.mxu0 0.0
  %1124 = vmatpush1.msra.mxu0 %v1115
  %1125 = vmatprep.subr.mxu0 0.0
  %1126 = vmatpush1.msra.mxu0 0.0
  %1127 = vmatprep.subr.mxu0 0.0
  %1128 = vmatpush1.msra.mxu0 0.0
  %1129 = vmatprep.subr.mxu0 0.0
  %1130 = vmatpush1.msra.mxu0 0.0
  %1131 = vmatprep.subr.mxu0 0.0
  %1132 = vmatpush1.msra.mxu0 0.0
  %1133 = vmatprep.subr.mxu0 0.0
  %1134 = vmatpush1.msra.mxu0 0.0
  %1135 = vmatprep.subr.mxu0 0.0
  %1136 = vmatpush1.msra.mxu0 0.0
  %1137 = vmatprep.subr.mxu0 0.0
  %1138 = vmatpush1.msra.mxu0 0.0
  %1139 = vmatprep.subr.mxu0 0.0
  %1140 = vmatpush1.msra.mxu0 0.0
  %1141 = vmatprep.subr.mxu0 0.0
  %1142 = vmatpush1.msra.mxu0 0.0
  %1143 = vmatprep.subr.mxu0 0.0
  %1144 = vmatpush1.msra.mxu0 0.0
  %1145 = vmatprep.subr.mxu0 0.0
  %1146 = vmatpush1.msra.mxu0 0.0
  %1147 = vmatprep.subr.mxu0 0.0
  %1148 = vmatpush1.msra.mxu0 0.0
  %1149 = vmatprep.subr.mxu0 0.0
  %1150 = vmatpush1.msra.mxu0 0.0
  %1151 = vmatprep.subr.mxu0 0.0
  %1152 = vmatpush1.msra.mxu0 0.0
  %1153 = vmatprep.subr.mxu0 0.0
  %1154 = vmatpush1.msra.mxu0 0.0
  %1155 = vmatprep.subr.mxu0 0.0
  %1156 = vmatpush1.msra.mxu0 0.0
  %1157 = vmatprep.subr.mxu0 0.0
  %1158 = vmatpush1.msra.mxu0 0.0
  %1159 = vmatprep.subr.mxu0 0.0
  %1160 = vmatpush1.msra.mxu0 0.0
  %1161 = vmatprep.subr.mxu0 0.0
  %1162 = vmatpush1.msra.mxu0 0.0
  %1163 = vmatprep.subr.mxu0 0.0
  %1164 = vmatpush1.msra.mxu0 0.0
  %1165 = vmatprep.subr.mxu0 0.0
  %1166 = vmatpush1.msra.mxu0 0.0
  %1167 = vmatprep.subr.mxu0 0.0
  %1168 = vmatpush1.msra.mxu0 0.0
  %1169 = vmatprep.subr.mxu0 0.0
  %1170 = vmatpush1.msra.mxu0 0.0
  %1171 = vmatprep.subr.mxu0 0.0
  %1172 = vmatpush1.msra.mxu0 0.0
  %1173 = vmatprep.subr.mxu0 0.0
  %1174 = vmatpush1.msra.mxu0 0.0
  %1175 = vmatprep.subr.mxu0 0.0
  %1176 = vmatpush1.msra.mxu0 0.0
  %1177 = vmatprep.subr.mxu0 0.0
  %1178 = vmatpush1.msra.mxu0 0.0
  %1179 = vmatprep.subr.mxu0 0.0
  %1180 = vmatpush1.msra.mxu0 0.0
  %1181 = vmatprep.subr.mxu0 0.0
  %1182 = vmatpush1.msra.mxu0 0.0
  %1183 = vmatprep.subr.mxu0 0.0
  %1184 = vmatpush1.msra.mxu0 0.0
  %1185 = vmatprep.mubr.f32.mxu0 0.0
  %1186 = vmatmul.mubr.f32.gmra.mrb[0].mxu0 %v1119
  %v1187 = vpop.f32.mrb[0].mxu0
  %v1188 = vadd.f32 0.0, %v1187
  %v1189 = vpop.f32.mrb[0].mxu0
  %1190 = vdwg.mxu0
  %v1191 = vadd.f32 %v1113, %v1188
  %s1192 = scalar_lea.vmem %s7, 16
  %v1193 = vld [vmem:[%s1192] sm:$0xff]
  %v1194 = vld [vmem:[%s1192 + $0x8] sm:$0xff]
  %1196 = vrot.lane.b32.xlu0 %v1099, 112
  %v1197 = vpop.permute.xlu0 %1196
  %v1198 = vsel %vm187, %v1197, 0
  %1200 = vmatprep.subr.mxu0 0.0
  %1201 = vmatpush1.msra.mxu0 %v1193
  %1202 = vmatprep.subr.mxu0 0.0
  %1203 = vmatpush1.msra.mxu0 %v1194
  %1204 = vmatprep.subr.mxu0 0.0
  %1205 = vmatpush1.msra.mxu0 0.0
  %1206 = vmatprep.subr.mxu0 0.0
  %1207 = vmatpush1.msra.mxu0 0.0
  %1208 = vmatprep.subr.mxu0 0.0
  %1209 = vmatpush1.msra.mxu0 0.0
  %1210 = vmatprep.subr.mxu0 0.0
  %1211 = vmatpush1.msra.mxu0 0.0
  %1212 = vmatprep.subr.mxu0 0.0
  %1213 = vmatpush1.msra.mxu0 0.0
  %1214 = vmatprep.subr.mxu0 0.0
  %1215 = vmatpush1.msra.mxu0 0.0
  %1216 = vmatprep.subr.mxu0 0.0
  %1217 = vmatpush1.msra.mxu0 0.0
  %1218 = vmatprep.subr.mxu0 0.0
  %1219 = vmatpush1.msra.mxu0 0.0
  %1220 = vmatprep.subr.mxu0 0.0
  %1221 = vmatpush1.msra.mxu0 0.0
  %1222 = vmatprep.subr.mxu0 0.0
  %1223 = vmatpush1.msra.mxu0 0.0
  %1224 = vmatprep.subr.mxu0 0.0
  %1225 = vmatpush1.msra.mxu0 0.0
  %1226 = vmatprep.subr.mxu0 0.0
  %1227 = vmatpush1.msra.mxu0 0.0
  %1228 = vmatprep.subr.mxu0 0.0
  %1229 = vmatpush1.msra.mxu0 0.0
  %1230 = vmatprep.subr.mxu0 0.0
  %1231 = vmatpush1.msra.mxu0 0.0
  %1232 = vmatprep.subr.mxu0 0.0
  %1233 = vmatpush1.msra.mxu0 0.0
  %1234 = vmatprep.subr.mxu0 0.0
  %1235 = vmatpush1.msra.mxu0 0.0
  %1236 = vmatprep.subr.mxu0 0.0
  %1237 = vmatpush1.msra.mxu0 0.0
  %1238 = vmatprep.subr.mxu0 0.0
  %1239 = vmatpush1.msra.mxu0 0.0
  %1240 = vmatprep.subr.mxu0 0.0
  %1241 = vmatpush1.msra.mxu0 0.0
  %1242 = vmatprep.subr.mxu0 0.0
  %1243 = vmatpush1.msra.mxu0 0.0
  %1244 = vmatprep.subr.mxu0 0.0
  %1245 = vmatpush1.msra.mxu0 0.0
  %1246 = vmatprep.subr.mxu0 0.0
  %1247 = vmatpush1.msra.mxu0 0.0
  %1248 = vmatprep.subr.mxu0 0.0
  %1249 = vmatpush1.msra.mxu0 0.0
  %1250 = vmatprep.subr.mxu0 0.0
  %1251 = vmatpush1.msra.mxu0 0.0
  %1252 = vmatprep.subr.mxu0 0.0
  %1253 = vmatpush1.msra.mxu0 0.0
  %1254 = vmatprep.subr.mxu0 0.0
  %1255 = vmatpush1.msra.mxu0 0.0
  %1256 = vmatprep.subr.mxu0 0.0
  %1257 = vmatpush1.msra.mxu0 0.0
  %1258 = vmatprep.subr.mxu0 0.0
  %1259 = vmatpush1.msra.mxu0 0.0
  %1260 = vmatprep.subr.mxu0 0.0
  %1261 = vmatpush1.msra.mxu0 0.0
  %1262 = vmatprep.subr.mxu0 0.0
  %1263 = vmatpush1.msra.mxu0 0.0
  %1264 = vmatprep.mubr.f32.mxu0 0.0
  %1265 = vmatmul.mubr.f32.gmra.mrb[0].mxu0 %v1198
  %v1266 = vpop.f32.mrb[0].mxu0
  %v1267 = vadd.f32 0.0, %v1266
  %v1268 = vpop.f32.mrb[0].mxu0
  %1269 = vdwg.mxu0
  %v1270 = vadd.f32 %v1191, %v1267
  %s1271 = scalar_lea.vmem %s7, 32
  %v1272 = vld [vmem:[%s1271] sm:$0xff]
  %v1273 = vld [vmem:[%s1271 + $0x8] sm:$0xff]
  %1275 = vrot.lane.b32.xlu0 %v1100, 112
  %v1276 = vpop.permute.xlu0 %1275
  %v1277 = vsel %vm187, %v1276, 0
  %1279 = vmatprep.subr.mxu0 0.0
  %1280 = vmatpush1.msra.mxu0 %v1272
  %1281 = vmatprep.subr.mxu0 0.0
  %1282 = vmatpush1.msra.mxu0 %v1273
  %1283 = vmatprep.subr.mxu0 0.0
  %1284 = vmatpush1.msra.mxu0 0.0
  %1285 = vmatprep.subr.mxu0 0.0
  %1286 = vmatpush1.msra.mxu0 0.0
  %1287 = vmatprep.subr.mxu0 0.0
  %1288 = vmatpush1.msra.mxu0 0.0
  %1289 = vmatprep.subr.mxu0 0.0
  %1290 = vmatpush1.msra.mxu0 0.0
  %1291 = vmatprep.subr.mxu0 0.0
  %1292 = vmatpush1.msra.mxu0 0.0
  %1293 = vmatprep.subr.mxu0 0.0
  %1294 = vmatpush1.msra.mxu0 0.0
  %1295 = vmatprep.subr.mxu0 0.0
  %1296 = vmatpush1.msra.mxu0 0.0
  %1297 = vmatprep.subr.mxu0 0.0
  %1298 = vmatpush1.msra.mxu0 0.0
  %1299 = vmatprep.subr.mxu0 0.0
  %1300 = vmatpush1.msra.mxu0 0.0
  %1301 = vmatprep.subr.mxu0 0.0
  %1302 = vmatpush1.msra.mxu0 0.0
  %1303 = vmatprep.subr.mxu0 0.0
  %1304 = vmatpush1.msra.mxu0 0.0
  %1305 = vmatprep.subr.mxu0 0.0
  %1306 = vmatpush1.msra.mxu0 0.0
  %1307 = vmatprep.subr.mxu0 0.0
  %1308 = vmatpush1.msra.mxu0 0.0
  %1309 = vmatprep.subr.mxu0 0.0
  %1310 = vmatpush1.msra.mxu0 0.0
  %1311 = vmatprep.subr.mxu0 0.0
  %1312 = vmatpush1.msra.mxu0 0.0
  %1313 = vmatprep.subr.mxu0 0.0
  %1314 = vmatpush1.msra.mxu0 0.0
  %1315 = vmatprep.subr.mxu0 0.0
  %1316 = vmatpush1.msra.mxu0 0.0
  %1317 = vmatprep.subr.mxu0 0.0
  %1318 = vmatpush1.msra.mxu0 0.0
  %1319 = vmatprep.subr.mxu0 0.0
  %1320 = vmatpush1.msra.mxu0 0.0
  %1321 = vmatprep.subr.mxu0 0.0
  %1322 = vmatpush1.msra.mxu0 0.0
  %1323 = vmatprep.subr.mxu0 0.0
  %1324 = vmatpush1.msra.mxu0 0.0
  %1325 = vmatprep.subr.mxu0 0.0
  %1326 = vmatpush1.msra.mxu0 0.0
  %1327 = vmatprep.subr.mxu0 0.0
  %1328 = vmatpush1.msra.mxu0 0.0
  %1329 = vmatprep.subr.mxu0 0.0
  %1330 = vmatpush1.msra.mxu0 0.0
  %1331 = vmatprep.subr.mxu0 0.0
  %1332 = vmatpush1.msra.mxu0 0.0
  %1333 = vmatprep.subr.mxu0 0.0
  %1334 = vmatpush1.msra.mxu0 0.0
  %1335 = vmatprep.subr.mxu0 0.0
  %1336 = vmatpush1.msra.mxu0 0.0
  %1337 = vmatprep.subr.mxu0 0.0
  %1338 = vmatpush1.msra.mxu0 0.0
  %1339 = vmatprep.subr.mxu0 0.0
  %1340 = vmatpush1.msra.mxu0 0.0
  %1341 = vmatprep.subr.mxu0 0.0
  %1342 = vmatpush1.msra.mxu0 0.0
  %1343 = vmatprep.mubr.f32.mxu0 0.0
  %1344 = vmatmul.mubr.f32.gmra.mrb[0].mxu0 %v1277
  %v1345 = vpop.f32.mrb[0].mxu0
  %v1346 = vadd.f32 0.0, %v1345
  %v1347 = vpop.f32.mrb[0].mxu0
  %1348 = vdwg.mxu0
  %v1349 = vadd.f32 %v1270, %v1346
  %s1350 = scalar_lea.vmem %s7, 48
  %v1351 = vld [vmem:[%s1350] sm:$0xff]
  %v1352 = vld [vmem:[%s1350 + $0x8] sm:$0xff]
  %1354 = vrot.lane.b32.xlu0 %v1101, 112
  %v1355 = vpop.permute.xlu0 %1354
  %v1356 = vsel %vm187, %v1355, 0
  %1358 = vmatprep.subr.mxu0 0.0
  %1359 = vmatpush1.msra.mxu0 %v1351
  %1360 = vmatprep.subr.mxu0 0.0
  %1361 = vmatpush1.msra.mxu0 %v1352
  %1362 = vmatprep.subr.mxu0 0.0
  %1363 = vmatpush1.msra.mxu0 0.0
  %1364 = vmatprep.subr.mxu0 0.0
  %1365 = vmatpush1.msra.mxu0 0.0
  %1366 = vmatprep.subr.mxu0 0.0
  %1367 = vmatpush1.msra.mxu0 0.0
  %1368 = vmatprep.subr.mxu0 0.0
  %1369 = vmatpush1.msra.mxu0 0.0
  %1370 = vmatprep.subr.mxu0 0.0
  %1371 = vmatpush1.msra.mxu0 0.0
  %1372 = vmatprep.subr.mxu0 0.0
  %1373 = vmatpush1.msra.mxu0 0.0
  %1374 = vmatprep.subr.mxu0 0.0
  %1375 = vmatpush1.msra.mxu0 0.0
  %1376 = vmatprep.subr.mxu0 0.0
  %1377 = vmatpush1.msra.mxu0 0.0
  %1378 = vmatprep.subr.mxu0 0.0
  %1379 = vmatpush1.msra.mxu0 0.0
  %1380 = vmatprep.subr.mxu0 0.0
  %1381 = vmatpush1.msra.mxu0 0.0
  %1382 = vmatprep.subr.mxu0 0.0
  %1383 = vmatpush1.msra.mxu0 0.0
  %1384 = vmatprep.subr.mxu0 0.0
  %1385 = vmatpush1.msra.mxu0 0.0
  %1386 = vmatprep.subr.mxu0 0.0
  %1387 = vmatpush1.msra.mxu0 0.0
  %1388 = vmatprep.subr.mxu0 0.0
  %1389 = vmatpush1.msra.mxu0 0.0
  %1390 = vmatprep.subr.mxu0 0.0
  %1391 = vmatpush1.msra.mxu0 0.0
  %1392 = vmatprep.subr.mxu0 0.0
  %1393 = vmatpush1.msra.mxu0 0.0
  %1394 = vmatprep.subr.mxu0 0.0
  %1395 = vmatpush1.msra.mxu0 0.0
  %1396 = vmatprep.subr.mxu0 0.0
  %1397 = vmatpush1.msra.mxu0 0.0
  %1398 = vmatprep.subr.mxu0 0.0
  %1399 = vmatpush1.msra.mxu0 0.0
  %1400 = vmatprep.subr.mxu0 0.0
  %1401 = vmatpush1.msra.mxu0 0.0
  %1402 = vmatprep.subr.mxu0 0.0
  %1403 = vmatpush1.msra.mxu0 0.0
  %1404 = vmatprep.subr.mxu0 0.0
  %1405 = vmatpush1.msra.mxu0 0.0
  %1406 = vmatprep.subr.mxu0 0.0
  %1407 = vmatpush1.msra.mxu0 0.0
  %1408 = vmatprep.subr.mxu0 0.0
  %1409 = vmatpush1.msra.mxu0 0.0
  %1410 = vmatprep.subr.mxu0 0.0
  %1411 = vmatpush1.msra.mxu0 0.0
  %1412 = vmatprep.subr.mxu0 0.0
  %1413 = vmatpush1.msra.mxu0 0.0
  %1414 = vmatprep.subr.mxu0 0.0
  %1415 = vmatpush1.msra.mxu0 0.0
  %1416 = vmatprep.subr.mxu0 0.0
  %1417 = vmatpush1.msra.mxu0 0.0
  %1418 = vmatprep.subr.mxu0 0.0
  %1419 = vmatpush1.msra.mxu0 0.0
  %1420 = vmatprep.subr.mxu0 0.0
  %1421 = vmatpush1.msra.mxu0 0.0
  %1422 = vmatprep.mubr.f32.mxu0 0.0
  %1423 = vmatmul.mubr.f32.gmra.mrb[0].mxu0 %v1356
  %v1424 = vpop.f32.mrb[0].mxu0
  %v1425 = vadd.f32 0.0, %v1424
  %v1426 = vpop.f32.mrb[0].mxu0
  %1427 = vdwg.mxu0
  %v1428 = vadd.f32 %v1349, %v1425
  %s1429 = scalar_lea.vmem %s7, 64
  %v1430 = vld [vmem:[%s1429] sm:$0xff]
  %v1431 = vld [vmem:[%s1429 + $0x8] sm:$0xff]
  %1433 = vrot.lane.b32.xlu0 %v1102, 112
  %v1434 = vpop.permute.xlu0 %1433
  %v1435 = vsel %vm187, %v1434, 0
  %1437 = vmatprep.subr.mxu0 0.0
  %1438 = vmatpush1.msra.mxu0 %v1430
  %1439 = vmatprep.subr.mxu0 0.0
  %1440 = vmatpush1.msra.mxu0 %v1431
  %1441 = vmatprep.subr.mxu0 0.0
  %1442 = vmatpush1.msra.mxu0 0.0
  %1443 = vmatprep.subr.mxu0 0.0
  %1444 = vmatpush1.msra.mxu0 0.0
  %1445 = vmatprep.subr.mxu0 0.0
  %1446 = vmatpush1.msra.mxu0 0.0
  %1447 = vmatprep.subr.mxu0 0.0
  %1448 = vmatpush1.msra.mxu0 0.0
  %1449 = vmatprep.subr.mxu0 0.0
  %1450 = vmatpush1.msra.mxu0 0.0
  %1451 = vmatprep.subr.mxu0 0.0
  %1452 = vmatpush1.msra.mxu0 0.0
  %1453 = vmatprep.subr.mxu0 0.0
  %1454 = vmatpush1.msra.mxu0 0.0
  %1455 = vmatprep.subr.mxu0 0.0
  %1456 = vmatpush1.msra.mxu0 0.0
  %1457 = vmatprep.subr.mxu0 0.0
  %1458 = vmatpush1.msra.mxu0 0.0
  %1459 = vmatprep.subr.mxu0 0.0
  %1460 = vmatpush1.msra.mxu0 0.0
  %1461 = vmatprep.subr.mxu0 0.0
  %1462 = vmatpush1.msra.mxu0 0.0
  %1463 = vmatprep.subr.mxu0 0.0
  %1464 = vmatpush1.msra.mxu0 0.0
  %1465 = vmatprep.subr.mxu0 0.0
  %1466 = vmatpush1.msra.mxu0 0.0
  %1467 = vmatprep.subr.mxu0 0.0
  %1468 = vmatpush1.msra.mxu0 0.0
  %1469 = vmatprep.subr.mxu0 0.0
  %1470 = vmatpush1.msra.mxu0 0.0
  %1471 = vmatprep.subr.mxu0 0.0
  %1472 = vmatpush1.msra.mxu0 0.0
  %1473 = vmatprep.subr.mxu0 0.0
  %1474 = vmatpush1.msra.mxu0 0.0
  %1475 = vmatprep.subr.mxu0 0.0
  %1476 = vmatpush1.msra.mxu0 0.0
  %1477 = vmatprep.subr.mxu0 0.0
  %1478 = vmatpush1.msra.mxu0 0.0
  %1479 = vmatprep.subr.mxu0 0.0
  %1480 = vmatpush1.msra.mxu0 0.0
  %1481 = vmatprep.subr.mxu0 0.0
  %1482 = vmatpush1.msra.mxu0 0.0
  %1483 = vmatprep.subr.mxu0 0.0
  %1484 = vmatpush1.msra.mxu0 0.0
  %1485 = vmatprep.subr.mxu0 0.0
  %1486 = vmatpush1.msra.mxu0 0.0
  %1487 = vmatprep.subr.mxu0 0.0
  %1488 = vmatpush1.msra.mxu0 0.0
  %1489 = vmatprep.subr.mxu0 0.0
  %1490 = vmatpush1.msra.mxu0 0.0
  %1491 = vmatprep.subr.mxu0 0.0
  %1492 = vmatpush1.msra.mxu0 0.0
  %1493 = vmatprep.subr.mxu0 0.0
  %1494 = vmatpush1.msra.mxu0 0.0
  %1495 = vmatprep.subr.mxu0 0.0
  %1496 = vmatpush1.msra.mxu0 0.0
  %1497 = vmatprep.subr.mxu0 0.0
  %1498 = vmatpush1.msra.mxu0 0.0
  %1499 = vmatprep.subr.mxu0 0.0
  %1500 = vmatpush1.msra.mxu0 0.0
  %1501 = vmatprep.mubr.f32.mxu0 0.0
  %1502 = vmatmul.mubr.f32.gmra.mrb[0].mxu0 %v1435
  %v1503 = vpop.f32.mrb[0].mxu0
  %v1504 = vadd.f32 0.0, %v1503
  %v1505 = vpop.f32.mrb[0].mxu0
  %1506 = vdwg.mxu0
  %v1507 = vadd.f32 %v1428, %v1504
  %s1508 = scalar_lea.vmem %s7, 80
  %v1509 = vld [vmem:[%s1508] sm:$0xff]
  %v1510 = vld [vmem:[%s1508 + $0x8] sm:$0xff]
  %1512 = vrot.lane.b32.xlu0 %v1103, 112
  %v1513 = vpop.permute.xlu0 %1512
  %v1514 = vsel %vm187, %v1513, 0
  %1516 = vmatprep.subr.mxu0 0.0
  %1517 = vmatpush1.msra.mxu0 %v1509
  %1518 = vmatprep.subr.mxu0 0.0
  %1519 = vmatpush1.msra.mxu0 %v1510
  %1520 = vmatprep.subr.mxu0 0.0
  %1521 = vmatpush1.msra.mxu0 0.0
  %1522 = vmatprep.subr.mxu0 0.0
  %1523 = vmatpush1.msra.mxu0 0.0
  %1524 = vmatprep.subr.mxu0 0.0
  %1525 = vmatpush1.msra.mxu0 0.0
  %1526 = vmatprep.subr.mxu0 0.0
  %1527 = vmatpush1.msra.mxu0 0.0
  %1528 = vmatprep.subr.mxu0 0.0
  %1529 = vmatpush1.msra.mxu0 0.0
  %1530 = vmatprep.subr.mxu0 0.0
  %1531 = vmatpush1.msra.mxu0 0.0
  %1532 = vmatprep.subr.mxu0 0.0
  %1533 = vmatpush1.msra.mxu0 0.0
  %1534 = vmatprep.subr.mxu0 0.0
  %1535 = vmatpush1.msra.mxu0 0.0
  %1536 = vmatprep.subr.mxu0 0.0
  %1537 = vmatpush1.msra.mxu0 0.0
  %1538 = vmatprep.subr.mxu0 0.0
  %1539 = vmatpush1.msra.mxu0 0.0
  %1540 = vmatprep.subr.mxu0 0.0
  %1541 = vmatpush1.msra.mxu0 0.0
  %1542 = vmatprep.subr.mxu0 0.0
  %1543 = vmatpush1.msra.mxu0 0.0
  %1544 = vmatprep.subr.mxu0 0.0
  %1545 = vmatpush1.msra.mxu0 0.0
  %1546 = vmatprep.subr.mxu0 0.0
  %1547 = vmatpush1.msra.mxu0 0.0
  %1548 = vmatprep.subr.mxu0 0.0
  %1549 = vmatpush1.msra.mxu0 0.0
  %1550 = vmatprep.subr.mxu0 0.0
  %1551 = vmatpush1.msra.mxu0 0.0
  %1552 = vmatprep.subr.mxu0 0.0
  %1553 = vmatpush1.msra.mxu0 0.0
  %1554 = vmatprep.subr.mxu0 0.0
  %1555 = vmatpush1.msra.mxu0 0.0
  %1556 = vmatprep.subr.mxu0 0.0
  %1557 = vmatpush1.msra.mxu0 0.0
  %1558 = vmatprep.subr.mxu0 0.0
  %1559 = vmatpush1.msra.mxu0 0.0
  %1560 = vmatprep.subr.mxu0 0.0
  %1561 = vmatpush1.msra.mxu0 0.0
  %1562 = vmatprep.subr.mxu0 0.0
  %1563 = vmatpush1.msra.mxu0 0.0
  %1564 = vmatprep.subr.mxu0 0.0
  %1565 = vmatpush1.msra.mxu0 0.0
  %1566 = vmatprep.subr.mxu0 0.0
  %1567 = vmatpush1.msra.mxu0 0.0
  %1568 = vmatprep.subr.mxu0 0.0
  %1569 = vmatpush1.msra.mxu0 0.0
  %1570 = vmatprep.subr.mxu0 0.0
  %1571 = vmatpush1.msra.mxu0 0.0
  %1572 = vmatprep.subr.mxu0 0.0
  %1573 = vmatpush1.msra.mxu0 0.0
  %1574 = vmatprep.subr.mxu0 0.0
  %1575 = vmatpush1.msra.mxu0 0.0
  %1576 = vmatprep.subr.mxu0 0.0
  %1577 = vmatpush1.msra.mxu0 0.0
  %1578 = vmatprep.subr.mxu0 0.0
  %1579 = vmatpush1.msra.mxu0 0.0
  %1580 = vmatprep.mubr.f32.mxu0 0.0
  %1581 = vmatmul.mubr.f32.gmra.mrb[0].mxu0 %v1514
  %v1582 = vpop.f32.mrb[0].mxu0
  %v1583 = vadd.f32 0.0, %v1582
  %v1584 = vpop.f32.mrb[0].mxu0
  %1585 = vdwg.mxu0
  %v1586 = vadd.f32 %v1507, %v1583
  %s1587 = scalar_lea.vmem %s7, 96
  %v1588 = vld [vmem:[%s1587] sm:$0xff]
  %v1589 = vld [vmem:[%s1587 + $0x8] sm:$0xff]
  %1591 = vrot.lane.b32.xlu0 %v1104, 112
  %v1592 = vpop.permute.xlu0 %1591
  %v1593 = vsel %vm187, %v1592, 0
  %1595 = vmatprep.subr.mxu0 0.0
  %1596 = vmatpush1.msra.mxu0 %v1588
  %1597 = vmatprep.subr.mxu0 0.0
  %1598 = vmatpush1.msra.mxu0 %v1589
  %1599 = vmatprep.subr.mxu0 0.0
  %1600 = vmatpush1.msra.mxu0 0.0
  %1601 = vmatprep.subr.mxu0 0.0
  %1602 = vmatpush1.msra.mxu0 0.0
  %1603 = vmatprep.subr.mxu0 0.0
  %1604 = vmatpush1.msra.mxu0 0.0
  %1605 = vmatprep.subr.mxu0 0.0
  %1606 = vmatpush1.msra.mxu0 0.0
  %1607 = vmatprep.subr.mxu0 0.0
  %1608 = vmatpush1.msra.mxu0 0.0
  %1609 = vmatprep.subr.mxu0 0.0
  %1610 = vmatpush1.msra.mxu0 0.0
  %1611 = vmatprep.subr.mxu0 0.0
  %1612 = vmatpush1.msra.mxu0 0.0
  %1613 = vmatprep.subr.mxu0 0.0
  %1614 = vmatpush1.msra.mxu0 0.0
  %1615 = vmatprep.subr.mxu0 0.0
  %1616 = vmatpush1.msra.mxu0 0.0
  %1617 = vmatprep.subr.mxu0 0.0
  %1618 = vmatpush1.msra.mxu0 0.0
  %1619 = vmatprep.subr.mxu0 0.0
  %1620 = vmatpush1.msra.mxu0 0.0
  %1621 = vmatprep.subr.mxu0 0.0
  %1622 = vmatpush1.msra.mxu0 0.0
  %1623 = vmatprep.subr.mxu0 0.0
  %1624 = vmatpush1.msra.mxu0 0.0
  %1625 = vmatprep.subr.mxu0 0.0
  %1626 = vmatpush1.msra.mxu0 0.0
  %1627 = vmatprep.subr.mxu0 0.0
  %1628 = vmatpush1.msra.mxu0 0.0
  %1629 = vmatprep.subr.mxu0 0.0
  %1630 = vmatpush1.msra.mxu0 0.0
  %1631 = vmatprep.subr.mxu0 0.0
  %1632 = vmatpush1.msra.mxu0 0.0
  %1633 = vmatprep.subr.mxu0 0.0
  %1634 = vmatpush1.msra.mxu0 0.0
  %1635 = vmatprep.subr.mxu0 0.0
  %1636 = vmatpush1.msra.mxu0 0.0
  %1637 = vmatprep.subr.mxu0 0.0
  %1638 = vmatpush1.msra.mxu0 0.0
  %1639 = vmatprep.subr.mxu0 0.0
  %1640 = vmatpush1.msra.mxu0 0.0
  %1641 = vmatprep.subr.mxu0 0.0
  %1642 = vmatpush1.msra.mxu0 0.0
  %1643 = vmatprep.subr.mxu0 0.0
  %1644 = vmatpush1.msra.mxu0 0.0
  %1645 = vmatprep.subr.mxu0 0.0
  %1646 = vmatpush1.msra.mxu0 0.0
  %1647 = vmatprep.subr.mxu0 0.0
  %1648 = vmatpush1.msra.mxu0 0.0
  %1649 = vmatprep.subr.mxu0 0.0
  %1650 = vmatpush1.msra.mxu0 0.0
  %1651 = vmatprep.subr.mxu0 0.0
  %1652 = vmatpush1.msra.mxu0 0.0
  %1653 = vmatprep.subr.mxu0 0.0
  %1654 = vmatpush1.msra.mxu0 0.0
  %1655 = vmatprep.subr.mxu0 0.0
  %1656 = vmatpush1.msra.mxu0 0.0
  %1657 = vmatprep.subr.mxu0 0.0
  %1658 = vmatpush1.msra.mxu0 0.0
  %1659 = vmatprep.mubr.f32.mxu0 0.0
  %1660 = vmatmul.mubr.f32.gmra.mrb[0].mxu0 %v1593
  %v1661 = vpop.f32.mrb[0].mxu0
  %v1662 = vadd.f32 0.0, %v1661
  %v1663 = vpop.f32.mrb[0].mxu0
  %1664 = vdwg.mxu0
  %v1665 = vadd.f32 %v1586, %v1662
  %s1666 = scalar_lea.vmem %s7, 112
  %v1667 = vld [vmem:[%s1666] sm:$0xff]
  %v1668 = vld [vmem:[%s1666 + $0x8] sm:$0xff]
  %1670 = vrot.lane.b32.xlu0 %v1105, 112
  %v1671 = vpop.permute.xlu0 %1670
  %v1672 = vsel %vm187, %v1671, 0
  %1674 = vmatprep.subr.mxu0 0.0
  %1675 = vmatpush1.msra.mxu0 %v1667
  %1676 = vmatprep.subr.mxu0 0.0
  %1677 = vmatpush1.msra.mxu0 %v1668
  %1678 = vmatprep.subr.mxu0 0.0
  %1679 = vmatpush1.msra.mxu0 0.0
  %1680 = vmatprep.subr.mxu0 0.0
  %1681 = vmatpush1.msra.mxu0 0.0
  %1682 = vmatprep.subr.mxu0 0.0
  %1683 = vmatpush1.msra.mxu0 0.0
  %1684 = vmatprep.subr.mxu0 0.0
  %1685 = vmatpush1.msra.mxu0 0.0
  %1686 = vmatprep.subr.mxu0 0.0
  %1687 = vmatpush1.msra.mxu0 0.0
  %1688 = vmatprep.subr.mxu0 0.0
  %1689 = vmatpush1.msra.mxu0 0.0
  %1690 = vmatprep.subr.mxu0 0.0
  %1691 = vmatpush1.msra.mxu0 0.0
  %1692 = vmatprep.subr.mxu0 0.0
  %1693 = vmatpush1.msra.mxu0 0.0
  %1694 = vmatprep.subr.mxu0 0.0
  %1695 = vmatpush1.msra.mxu0 0.0
  %1696 = vmatprep.subr.mxu0 0.0
  %1697 = vmatpush1.msra.mxu0 0.0
  %1698 = vmatprep.subr.mxu0 0.0
  %1699 = vmatpush1.msra.mxu0 0.0
  %1700 = vmatprep.subr.mxu0 0.0
  %1701 = vmatpush1.msra.mxu0 0.0
  %1702 = vmatprep.subr.mxu0 0.0
  %1703 = vmatpush1.msra.mxu0 0.0
  %1704 = vmatprep.subr.mxu0 0.0
  %1705 = vmatpush1.msra.mxu0 0.0
  %1706 = vmatprep.subr.mxu0 0.0
  %1707 = vmatpush1.msra.mxu0 0.0
  %1708 = vmatprep.subr.mxu0 0.0
  %1709 = vmatpush1.msra.mxu0 0.0
  %1710 = vmatprep.subr.mxu0 0.0
  %1711 = vmatpush1.msra.mxu0 0.0
  %1712 = vmatprep.subr.mxu0 0.0
  %1713 = vmatpush1.msra.mxu0 0.0
  %1714 = vmatprep.subr.mxu0 0.0
  %1715 = vmatpush1.msra.mxu0 0.0
  %1716 = vmatprep.subr.mxu0 0.0
  %1717 = vmatpush1.msra.mxu0 0.0
  %1718 = vmatprep.subr.mxu0 0.0
  %1719 = vmatpush1.msra.mxu0 0.0
  %1720 = vmatprep.subr.mxu0 0.0
  %1721 = vmatpush1.msra.mxu0 0.0
  %1722 = vmatprep.subr.mxu0 0.0
  %1723 = vmatpush1.msra.mxu0 0.0
  %1724 = vmatprep.subr.mxu0 0.0
  %1725 = vmatpush1.msra.mxu0 0.0
  %1726 = vmatprep.subr.mxu0 0.0
  %1727 = vmatpush1.msra.mxu0 0.0
  %1728 = vmatprep.subr.mxu0 0.0
  %1729 = vmatpush1.msra.mxu0 0.0
  %1730 = vmatprep.subr.mxu0 0.0
  %1731 = vmatpush1.msra.mxu0 0.0
  %1732 = vmatprep.subr.mxu0 0.0
  %1733 = vmatpush1.msra.mxu0 0.0
  %1734 = vmatprep.subr.mxu0 0.0
  %1735 = vmatpush1.msra.mxu0 0.0
  %1736 = vmatprep.subr.mxu0 0.0
  %1737 = vmatpush1.msra.mxu0 0.0
  %1738 = vmatprep.mubr.f32.mxu0 0.0
  %1739 = vmatmul.mubr.f32.gmra.mrb[0].mxu0 %v1672
  %v1740 = vpop.f32.mrb[0].mxu0
  %v1741 = vadd.f32 0.0, %v1740
  %v1742 = vpop.f32.mrb[0].mxu0
  %1743 = vdwg.mxu0
  %v1744 = vadd.f32 %v1665, %v1741
  %v1745 = vld [vmem:[%s1] sm:$0xff]
  %v1746 = vld [vmem:[%s2] sm:$0xff]
  %v1747 = vsub.f32 %v1745, %v1746
  %v1748 = vmul.f32 %v1747, %v1747
  %1750 = vrot.lane.b32.xlu0 %v1748, 127
  %v1751 = vpop.permute.xlu0 %1750
  %v1753 = vadd.f32 %v1748, %v1751
  %vm1754 = vcmp.lt.f32.partialorder %v1753, 1.0
  %v1755 = vsel %vm1754, 1, 0
  %1756 = vset.pattern.permute.xlu0 0
  %1757 = vperm.xlu0 %1756, %v1755
  %v1758 = vpop.permute.xlu0 %1757
  %vm1759 = vcmp.eq.s32.totalorder %v1758, 1
  %v1760 = vsel %vm1759, 0.0, %v1744
  %1761 = vst [vmem:[%s9] sm:$0xff] %v1760
  // Predicated region
  $region38: #{traj_estimator_threshold.1} parent=0 // pred_check
    _
  $region39: #{traj_estimator_threshold.1} parent=0 // pred_check_branch
    %1763 = sbr.rel (0) target = $region41
  $region40: #{traj_estimator_threshold.1} parent=0 // pred_region
    _
  $region41: #{traj_estimator_threshold.1} parent=0 // pred_fallthru
    _
  // Predicated region
  $region42: #{traj_estimator_threshold.1} parent=0 // pred_check
    _
  $region43: #{traj_estimator_threshold.1} parent=0 // pred_check_branch
    %1765 = sbr.rel (0) target = $region45
  $region44: #{traj_estimator_threshold.1} parent=0 // pred_region
    _
  $region45: #{traj_estimator_threshold.1} parent=0 // pred_fallthru
    _

</llo_original>
